<compile_context>
chip_gen: v7x
topology: tpu7x:2x2x1
jax: 0.10.0
libtpu: 0.0.40
codegen_flags: <defaults>
</compile_context>

<pallas_src>
import numpy as np

import jax
import jax.numpy as jnp
from jax.experimental import pallas as pl
from jax.experimental.pallas import tpu as pltpu

_BN_EPS = 1e-5   # torch.nn.BatchNorm2d default (YOLOX BaseConv uses it)
_TAPS = 9        # 3x3 conv


# ----------------------------- fused Pallas kernel ---------------------------

def _fused_yolox_kernel(p1_ref, w1_ref, b1_ref,        # backbone conv1 (3x3 s2)
                        g2_ref, w2_ref, b2_ref,        # backbone conv2 (3x3 s2)
                        ws_ref, bs_ref,                # head stem (1x1)
                        g3_ref, wcr_ref, bcr_ref,      # fused cls|reg 3x3 convs
                        wp_ref, bp_ref,                # fused reg|obj|cls preds
                        o_ref):
    f32, bf16 = jnp.float32, jnp.bfloat16
    m2 = o_ref.shape[0]                                # B * Ho2 * Wo2

    def mm(a, b):                                      # MXU matmul, f32 accum
        return jnp.dot(a, b, preferred_element_type=f32)

    def sigmoid(z):                                    # exp + recip on the EUP
        return pl.reciprocal(1.0 + jnp.exp(-z), approx=True)

    def silu(z):
        return z * sigmoid(z)

    # --- backbone conv1: Conv+BN+SiLU (patches of the raw input, K padded). --
    a1 = silu(mm(p1_ref[...], w1_ref[...]) + b1_ref[...]).astype(bf16)  # (M1,c1)

    # --- backbone conv2: Conv+BN+SiLU, stride 2, fully in-kernel. -----------
    # g2 gathers the 9 tap windows (tap-major rows, zero rows = padding);
    # then 9 tiny (m2,c1)@(c1,c2) matmuls accumulate in f32.
    p2 = mm(g2_ref[...], a1).astype(bf16)              # (9*m2, c1)
    acc = mm(p2[:m2], w2_ref[0])
    for t in range(1, _TAPS):
        acc = acc + mm(p2[t * m2:(t + 1) * m2], w2_ref[t])
    a2 = silu(acc + b2_ref[...]).astype(bf16)          # (m2, c2)

    # --- head stem: 1x1 Conv+BN+SiLU. ----------------------------------------
    s = silu(mm(a2, ws_ref[...]) + bs_ref[...]).astype(bf16)            # (m2,hid)

    # --- fused cls_conv | reg_conv: both consume s, weights concat'd on N. ---
    p3 = mm(g3_ref[...], s).astype(bf16)               # (9*m2, hid)
    acc = mm(p3[:m2], wcr_ref[0])
    for t in range(1, _TAPS):
        acc = acc + mm(p3[t * m2:(t + 1) * m2], wcr_ref[t])
    crfeat = silu(acc + bcr_ref[...]).astype(bf16)     # (m2, 2*hid) = [cls|reg]

    # --- fused predictors: one matmul emits [reg(4) | obj(1) | cls(nc)]. -----
    z = mm(crfeat, wp_ref[...]) + bp_ref[...]          # (m2, 5+nc) f32
    lane = jax.lax.broadcasted_iota(jnp.int32, z.shape, 1)
    o_ref[...] = jnp.where(lane >= 4, sigmoid(z), z).astype(o_ref.dtype)


def _run_fused(args, m_out, n_out):
    in_specs = [pl.BlockSpec(a.shape, lambda i, _n=a.ndim: (0,) * _n)
                for a in args]
    return pl.pallas_call(
        _fused_yolox_kernel,
        out_shape=jax.ShapeDtypeStruct((m_out, n_out), jnp.float32),
        grid=(1,),
        in_specs=in_specs,
        out_specs=pl.BlockSpec((m_out, n_out), lambda i: (0, 0)),
        compiler_params=pltpu.CompilerParams(
            dimension_semantics=("arbitrary",)),
    )(*args)


# ------------------------------ wrapper glue ----------------------------------

def _im2col_input(x_nhwc, k, stride, pad):
    """im2col of the *network input* only (it comes from HBM regardless).
    All convolutions on intermediates happen inside the fused kernel."""
    B, H, W, C = x_nhwc.shape
    xp = jnp.pad(x_nhwc, ((0, 0), (pad, pad), (pad, pad), (0, 0)))
    Ho = (H + 2 * pad - k) // stride + 1
    Wo = (W + 2 * pad - k) // stride + 1
    cols = []
    for dy in range(k):
        for dx in range(k):
            cols.append(xp[:, dy:dy + stride * Ho:stride,
                           dx:dx + stride * Wo:stride, :])
    patches = jnp.concatenate(cols, axis=-1)           # (B, Ho, Wo, k*k*C)
    return patches.reshape(B * Ho * Wo, k * k * C), (Ho, Wo)


def _weight_to_matrix(w):
    # (Cout, Cin, kh, kw) -> (kh*kw*Cin, Cout), rows ordered (dy, dx, cin),
    # matching both the input im2col and the in-kernel gather-matrix tap order.
    cout, cin, kh, kw = w.shape
    return jnp.transpose(w, (2, 3, 1, 0)).reshape(kh * kw * cin, cout)


def _fold_bn(p):
    """Conv(bias=False)+BN (eval) folded to a matmul weight + bias (f32)."""
    scale = p["gamma"] / jnp.sqrt(p["var"] + _BN_EPS)
    w = p["w"] * scale[:, None, None, None]
    b = p["beta"] - p["mean"] * scale
    return _weight_to_matrix(w), b


def _gather_matrix(B, H, W, k, stride, pad):
    """Constant 0/1 matrix (k*k*B*Ho*Wo, B*H*W): row-flattened NHWC activation
    -> tap-major conv windows.  Zero rows encode spatial zero padding, so no
    in-kernel pad op is needed.  Built from static shapes at trace time."""
    Ho = (H + 2 * pad - k) // stride + 1
    Wo = (W + 2 * pad - k) // stride + 1
    mo, mi = B * Ho * Wo, B * H * W
    g = np.zeros((k * k * mo, mi), np.float32)
    for dy in range(k):
        for dx in range(k):
            t = dy * k + dx
            for b in range(B):
                for ho in range(Ho):
                    hi = ho * stride + dy - pad
                    if not 0 <= hi < H:
                        continue
                    for wo in range(Wo):
                        wi = wo * stride + dx - pad
                        if 0 <= wi < W:
                            g[t * mo + b * Ho * Wo + ho * Wo + wo,
                              b * H * W + hi * W + wi] = 1.0
    return g


def yolox_deploy_forward(params, x_nchw):
    bf16 = jnp.bfloat16
    B = x_nchw.shape[0]
    x = jnp.transpose(x_nchw, (0, 2, 3, 1))            # NCHW -> NHWC

    # ---- fold BN, build matmul weights (f32 math, bf16 at the kernel edge) --
    w1, b1 = _fold_bn(params["bb_conv1"])              # (36,  c1)
    w2, b2 = _fold_bn(params["bb_conv2"])              # (72,  c2)
    ws, bs = _fold_bn(params["head_stem"])             # (c2,  hid)
    wc, bc = _fold_bn(params["cls_conv"])              # (9*hid, hid)
    wr, br = _fold_bn(params["reg_conv"])              # (9*hid, hid)
    wcr = jnp.concatenate([wc, wr], axis=1)            # fused [cls | reg] on N
    bcr = jnp.concatenate([bc, br])

    cls_m = _weight_to_matrix(params["cls_pred_w"])    # (hid, nc)
    reg_m = _weight_to_matrix(params["reg_pred_w"])    # (hid, 4)
    obj_m = _weight_to_matrix(params["obj_pred_w"])    # (hid, 1)
    hid, nc = cls_m.shape
    # Block weight so ONE matmul on [cls_feat | reg_feat] yields [reg|obj|cls].
    wp = jnp.concatenate([
        jnp.concatenate([jnp.zeros((hid, 5), jnp.float32), cls_m], axis=1),
        jnp.concatenate([reg_m, obj_m, jnp.zeros((hid, nc), jnp.float32)], axis=1),
    ], axis=0)                                         # (2*hid, 5+nc)
    bp = jnp.concatenate([params["reg_pred_b"],
                          params["obj_pred_b"],
                          params["cls_pred_b"]])       # (5+nc,)

    # ---- conv1 patches from the raw input; pad K (36) -> lane-dense 128. ----
    p1, (H1, W1) = _im2col_input(x, k=3, stride=2, pad=1)
    kpad = 128
    p1 = jnp.pad(p1, ((0, 0), (0, kpad - p1.shape[1])))
    w1 = jnp.pad(w1, ((0, kpad - w1.shape[0]), (0, 0)))

    # ---- constant spatial gather matrices for the in-kernel 3x3 convs. ------
    H2 = (H1 + 2 - 3) // 2 + 1
    W2 = (W1 + 2 - 3) // 2 + 1
    g2 = jnp.asarray(_gather_matrix(B, H1, W1, 3, 2, 1), bf16)   # conv2, s=2
    g3 = jnp.asarray(_gather_matrix(B, H2, W2, 3, 1, 1), bf16)   # cls/reg, s=1

    # ---- stack tap weights along a leading dim for clean in-kernel indexing -
    c1 = w2.shape[0] // _TAPS
    w2s = w2.reshape(_TAPS, c1, -1)
    wcrs = wcr.reshape(_TAPS, hid, -1)

    m_out = B * H2 * W2
    n_out = 5 + nc
    args = (p1.astype(bf16), w1.astype(bf16), b1.reshape(1, -1),
            g2, w2s.astype(bf16), b2.reshape(1, -1),
            ws.astype(bf16), bs.reshape(1, -1),
            g3, wcrs.astype(bf16), bcr.reshape(1, -1),
            wp.astype(bf16), bp.reshape(1, -1))
    out = _run_fused(args, m_out, n_out)               # (B*HW, 5+nc) f32
    # TODO(synk): decode_in_inference (grid offsets + stride scaling) omitted,
    # matching the decode_in_inference=False deploy/export path.
    return out.reshape(B, H2 * W2, n_out)              # [B, anchors, 5+nc]


# ------------------------- pure-JAX f32 reference -----------------------------

def reference_forward(params, x_nchw):
    """Numerical reference (no Pallas) with identical BN-fold semantics."""
    dn = ("NCHW", "OIHW", "NCHW")

    def conv(x, w, b, stride):
        k = w.shape[2]
        pad = (k - 1) // 2
        y = jax.lax.conv_general_dilated(
            x, w, (stride, stride), [(pad, pad), (pad, pad)],
            dimension_numbers=dn)
        return y + b[None, :, None, None]

    def conv_bn_silu(x, p, stride):
        scale = p["gamma"] / jnp.sqrt(p["var"] + _BN_EPS)
        w = p["w"] * scale[:, None, None, None]
        b = p["beta"] - p["mean"] * scale
        y = conv(x, w, b, stride)
        return y * jax.nn.sigmoid(y)

    f = conv_bn_silu(x_nchw, params["bb_conv1"], 2)
    f = conv_bn_silu(f, params["bb_conv2"], 2)
    s = conv_bn_silu(f, params["head_stem"], 1)
    cls_feat = conv_bn_silu(s, params["cls_conv"], 1)
    reg_feat = conv_bn_silu(s, params["reg_conv"], 1)
    cls_out = jax.nn.sigmoid(conv(cls_feat, params["cls_pred_w"], params["cls_pred_b"], 1))
    reg_out = conv(reg_feat, params["reg_pred_w"], params["reg_pred_b"], 1)
    obj_out = jax.nn.sigmoid(conv(reg_feat, params["obj_pred_w"], params["obj_pred_b"], 1))
    out = jnp.concatenate([reg_out, obj_out, cls_out], axis=1)   # (B, 5+nc, H, W)
    b_, c_, h_, w_ = out.shape
    return out.reshape(b_, c_, h_ * w_).transpose(0, 2, 1)


# ------------------------------ parameters ------------------------------------

def _conv_bn_params(key, cin, cout, k):
    k1, k2, k3, k4, k5 = jax.random.split(key, 5)
    return {
        "w": 0.1 * jax.random.normal(k1, (cout, cin, k, k), jnp.float32),
        "gamma": 1.0 + 0.05 * jax.random.normal(k2, (cout,), jnp.float32),
        "beta": 0.05 * jax.random.normal(k3, (cout,), jnp.float32),
        "mean": 0.05 * jax.random.normal(k4, (cout,), jnp.float32),
        "var": 1.0 + 0.05 * jnp.abs(jax.random.normal(k5, (cout,), jnp.float32)),
    }


def init_params(key, in_ch=4, num_classes=4):
    keys = jax.random.split(key, 8)
    c1, c2, hid = 8, 16, 16
    return {
        # backbone
        "bb_conv1": _conv_bn_params(keys[0], in_ch, c1, 3),
        "bb_conv2": _conv_bn_params(keys[1], c1, c2, 3),
        # head
        "head_stem": _conv_bn_params(keys[2], c2, hid, 1),
        "cls_conv": _conv_bn_params(keys[3], hid, hid, 3),
        "reg_conv": _conv_bn_params(keys[4], hid, hid, 3),
        "cls_pred_w": 0.1 * jax.random.normal(keys[5], (num_classes, hid, 1, 1), jnp.float32),
        "cls_pred_b": jnp.full((num_classes,), -2.0, jnp.float32),
        "reg_pred_w": 0.1 * jax.random.normal(keys[6], (4, hid, 1, 1), jnp.float32),
        "reg_pred_b": jnp.zeros((4,), jnp.float32),
        "obj_pred_w": 0.1 * jax.random.normal(keys[7], (1, hid, 1, 1), jnp.float32),
        "obj_pred_b": jnp.full((1,), -2.0, jnp.float32),
    }


# --------------------------------- main ----------------------------------------

if __name__ == "__main__":
    key = jax.random.PRNGKey(0)
    kx, kp = jax.random.split(key)
    x = jax.random.normal(kx, (2, 4, 16, 16), jnp.float32)   # NCHW, like PyTorch
    params = init_params(kp, in_ch=4, num_classes=4)

    out = jax.jit(yolox_deploy_forward)(params, x)
    jax.block_until_ready(out)

    assert out.shape == (2, 16, 9), out.shape
    assert bool(jnp.all(jnp.isfinite(out)))

    # Correctness vs. pure-JAX f32 reference (kernel uses bf16 MXU operands,
    # f32 accumulation, approx EUP reciprocal -> loose tolerance).
    ref = reference_forward(params, x)
    err = float(jnp.max(jnp.abs(out - ref)))
    assert err < 5e-2, f"max abs error vs reference: {err}"

    print("KERNEL_OK")
</pallas_src>

<mosaic_0001>
module attributes {stable_mosaic.version = 11 : i64} {
  func.func @_fused_yolox_kernel(%arg0: i32, %arg1: memref<128x128xbf16, #tpu.memory_space<vmem>>, %arg2: memref<128x8xbf16, #tpu.memory_space<vmem>>, %arg3: memref<1x8xf32, #tpu.memory_space<vmem>>, %arg4: memref<288x128xbf16, #tpu.memory_space<vmem>>, %arg5: memref<9x8x16xbf16, #tpu.memory_space<vmem>>, %arg6: memref<1x16xf32, #tpu.memory_space<vmem>>, %arg7: memref<16x16xbf16, #tpu.memory_space<vmem>>, %arg8: memref<1x16xf32, #tpu.memory_space<vmem>>, %arg9: memref<288x32xbf16, #tpu.memory_space<vmem>>, %arg10: memref<9x16x32xbf16, #tpu.memory_space<vmem>>, %arg11: memref<1x32xf32, #tpu.memory_space<vmem>>, %arg12: memref<32x9xbf16, #tpu.memory_space<vmem>>, %arg13: memref<1x9xf32, #tpu.memory_space<vmem>>, %arg14: memref<32x9xf32, #tpu.memory_space<vmem>>) attributes {dimension_semantics = [#tpu.dimension_semantics<arbitrary>], iteration_bounds = array<i64: 1>, scalar_prefetch = 0 : i64, scratch_operands = 0 : i64, tpu.core_type = #tpu.core_type<tc>, window_params = [{pipeline_mode = #tpu.pipeline_mode<synchronous>, transform_indices = @transform_0, window_bounds = array<i64: 128, 128>}, {pipeline_mode = #tpu.pipeline_mode<synchronous>, transform_indices = @transform_1, window_bounds = array<i64: 128, 8>}, {pipeline_mode = #tpu.pipeline_mode<synchronous>, transform_indices = @transform_2, window_bounds = array<i64: 1, 8>}, {pipeline_mode = #tpu.pipeline_mode<synchronous>, transform_indices = @transform_3, window_bounds = array<i64: 288, 128>}, {pipeline_mode = #tpu.pipeline_mode<synchronous>, transform_indices = @transform_4, window_bounds = array<i64: 9, 8, 16>}, {pipeline_mode = #tpu.pipeline_mode<synchronous>, transform_indices = @transform_5, window_bounds = array<i64: 1, 16>}, {pipeline_mode = #tpu.pipeline_mode<synchronous>, transform_indices = @transform_6, window_bounds = array<i64: 16, 16>}, {pipeline_mode = #tpu.pipeline_mode<synchronous>, transform_indices = @transform_7, window_bounds = array<i64: 1, 16>}, {pipeline_mode = #tpu.pipeline_mode<synchronous>, transform_indices = @transform_8, window_bounds = array<i64: 288, 32>}, {pipeline_mode = #tpu.pipeline_mode<synchronous>, transform_indices = @transform_9, window_bounds = array<i64: 9, 16, 32>}, {pipeline_mode = #tpu.pipeline_mode<synchronous>, transform_indices = @transform_10, window_bounds = array<i64: 1, 32>}, {pipeline_mode = #tpu.pipeline_mode<synchronous>, transform_indices = @transform_11, window_bounds = array<i64: 32, 9>}, {pipeline_mode = #tpu.pipeline_mode<synchronous>, transform_indices = @transform_12, window_bounds = array<i64: 1, 9>}, {pipeline_mode = #tpu.pipeline_mode<synchronous>, transform_indices = @transform_13, window_bounds = array<i64: 32, 9>}]} {
    %c0 = arith.constant 0 : index
    %c0_0 = arith.constant 0 : index
    %0 = vector.load %arg1[%c0, %c0_0] : memref<128x128xbf16, #tpu.memory_space<vmem>>, vector<128x128xbf16>
    %c0_1 = arith.constant 0 : index
    %c0_2 = arith.constant 0 : index
    %1 = vector.load %arg2[%c0_1, %c0_2] : memref<128x8xbf16, #tpu.memory_space<vmem>>, vector<128x8xbf16>
    %cst = arith.constant dense<0.000000e+00> : vector<128x8xf32>
    %2 = tpu.matmul %0, %1, %cst {dimension_numbers = #tpu.dot_dimension_numbers<[1], [0], [0], [1], [0, 0, 1, 1], [], []>} : vector<128x128xbf16>, vector<128x8xbf16>, vector<128x8xf32> -> vector<128x8xf32>
    %c0_3 = arith.constant 0 : index
    %c0_4 = arith.constant 0 : index
    %3 = vector.load %arg3[%c0_3, %c0_4] : memref<1x8xf32, #tpu.memory_space<vmem>>, vector<1x8xf32>
    %4 = vector.broadcast %3 : vector<1x8xf32> to vector<128x8xf32>
    %5 = arith.addf %2, %4 : vector<128x8xf32>
    %cst_5 = arith.constant 0.000000e+00 : f32
    %6 = vector.broadcast %cst_5 : f32 to vector<128x8xf32>
    %7 = arith.subf %6, %5 : vector<128x8xf32>
    %8 = math.exp %7 : vector<128x8xf32>
    %cst_6 = arith.constant 1.000000e+00 : f32
    %9 = vector.broadcast %cst_6 : f32 to vector<128x8xf32>
    %10 = arith.addf %9, %8 : vector<128x8xf32>
    %11 = tpu.reciprocal %10 {approx = true} : vector<128x8xf32> -> vector<128x8xf32>
    %12 = arith.mulf %5, %11 : vector<128x8xf32>
    %13 = arith.truncf %12 : vector<128x8xf32> to vector<128x8xbf16>
    %c0_7 = arith.constant 0 : index
    %c0_8 = arith.constant 0 : index
    %14 = vector.load %arg4[%c0_7, %c0_8] : memref<288x128xbf16, #tpu.memory_space<vmem>>, vector<288x128xbf16>
    %cst_9 = arith.constant dense<0.000000e+00> : vector<288x8xf32>
    %15 = tpu.matmul %14, %13, %cst_9 {dimension_numbers = #tpu.dot_dimension_numbers<[1], [0], [0], [1], [0, 0, 1, 1], [], []>} : vector<288x128xbf16>, vector<128x8xbf16>, vector<288x8xf32> -> vector<288x8xf32>
    %16 = arith.truncf %15 : vector<288x8xf32> to vector<288x8xbf16>
    %17 = vector.extract_strided_slice %16 {offsets = [0, 0], sizes = [32, 8], strides = [1, 1]} : vector<288x8xbf16> to vector<32x8xbf16>
    %c0_10 = arith.constant 0 : index
    %c0_11 = arith.constant 0 : index
    %c0_12 = arith.constant 0 : index
    %18 = vector.load %arg5[%c0_10, %c0_11, %c0_12] : memref<9x8x16xbf16, #tpu.memory_space<vmem>>, vector<1x8x16xbf16>
    %19 = vector.shape_cast %18 : vector<1x8x16xbf16> to vector<8x16xbf16>
    %cst_13 = arith.constant dense<0.000000e+00> : vector<32x16xf32>
    %20 = tpu.matmul %17, %19, %cst_13 {dimension_numbers = #tpu.dot_dimension_numbers<[1], [0], [0], [1], [0, 0, 1, 1], [], []>} : vector<32x8xbf16>, vector<8x16xbf16>, vector<32x16xf32> -> vector<32x16xf32>
    %21 = vector.extract_strided_slice %16 {offsets = [32, 0], sizes = [32, 8], strides = [1, 1]} : vector<288x8xbf16> to vector<32x8xbf16>
    %c1 = arith.constant 1 : index
    %c0_14 = arith.constant 0 : index
    %c0_15 = arith.constant 0 : index
    %22 = vector.load %arg5[%c1, %c0_14, %c0_15] : memref<9x8x16xbf16, #tpu.memory_space<vmem>>, vector<1x8x16xbf16>
    %23 = vector.shape_cast %22 : vector<1x8x16xbf16> to vector<8x16xbf16>
    %cst_16 = arith.constant dense<0.000000e+00> : vector<32x16xf32>
    %24 = tpu.matmul %21, %23, %cst_16 {dimension_numbers = #tpu.dot_dimension_numbers<[1], [0], [0], [1], [0, 0, 1, 1], [], []>} : vector<32x8xbf16>, vector<8x16xbf16>, vector<32x16xf32> -> vector<32x16xf32>
    %25 = arith.addf %20, %24 : vector<32x16xf32>
    %26 = vector.extract_strided_slice %16 {offsets = [64, 0], sizes = [32, 8], strides = [1, 1]} : vector<288x8xbf16> to vector<32x8xbf16>
    %c2 = arith.constant 2 : index
    %c0_17 = arith.constant 0 : index
    %c0_18 = arith.constant 0 : index
    %27 = vector.load %arg5[%c2, %c0_17, %c0_18] : memref<9x8x16xbf16, #tpu.memory_space<vmem>>, vector<1x8x16xbf16>
    %28 = vector.shape_cast %27 : vector<1x8x16xbf16> to vector<8x16xbf16>
    %cst_19 = arith.constant dense<0.000000e+00> : vector<32x16xf32>
    %29 = tpu.matmul %26, %28, %cst_19 {dimension_numbers = #tpu.dot_dimension_numbers<[1], [0], [0], [1], [0, 0, 1, 1], [], []>} : vector<32x8xbf16>, vector<8x16xbf16>, vector<32x16xf32> -> vector<32x16xf32>
    %30 = arith.addf %25, %29 : vector<32x16xf32>
    %31 = vector.extract_strided_slice %16 {offsets = [96, 0], sizes = [32, 8], strides = [1, 1]} : vector<288x8xbf16> to vector<32x8xbf16>
    %c3 = arith.constant 3 : index
    %c0_20 = arith.constant 0 : index
    %c0_21 = arith.constant 0 : index
    %32 = vector.load %arg5[%c3, %c0_20, %c0_21] : memref<9x8x16xbf16, #tpu.memory_space<vmem>>, vector<1x8x16xbf16>
    %33 = vector.shape_cast %32 : vector<1x8x16xbf16> to vector<8x16xbf16>
    %cst_22 = arith.constant dense<0.000000e+00> : vector<32x16xf32>
    %34 = tpu.matmul %31, %33, %cst_22 {dimension_numbers = #tpu.dot_dimension_numbers<[1], [0], [0], [1], [0, 0, 1, 1], [], []>} : vector<32x8xbf16>, vector<8x16xbf16>, vector<32x16xf32> -> vector<32x16xf32>
    %35 = arith.addf %30, %34 : vector<32x16xf32>
    %36 = vector.extract_strided_slice %16 {offsets = [128, 0], sizes = [32, 8], strides = [1, 1]} : vector<288x8xbf16> to vector<32x8xbf16>
    %c4 = arith.constant 4 : index
    %c0_23 = arith.constant 0 : index
    %c0_24 = arith.constant 0 : index
    %37 = vector.load %arg5[%c4, %c0_23, %c0_24] : memref<9x8x16xbf16, #tpu.memory_space<vmem>>, vector<1x8x16xbf16>
    %38 = vector.shape_cast %37 : vector<1x8x16xbf16> to vector<8x16xbf16>
    %cst_25 = arith.constant dense<0.000000e+00> : vector<32x16xf32>
    %39 = tpu.matmul %36, %38, %cst_25 {dimension_numbers = #tpu.dot_dimension_numbers<[1], [0], [0], [1], [0, 0, 1, 1], [], []>} : vector<32x8xbf16>, vector<8x16xbf16>, vector<32x16xf32> -> vector<32x16xf32>
    %40 = arith.addf %35, %39 : vector<32x16xf32>
    %41 = vector.extract_strided_slice %16 {offsets = [160, 0], sizes = [32, 8], strides = [1, 1]} : vector<288x8xbf16> to vector<32x8xbf16>
    %c5 = arith.constant 5 : index
    %c0_26 = arith.constant 0 : index
    %c0_27 = arith.constant 0 : index
    %42 = vector.load %arg5[%c5, %c0_26, %c0_27] : memref<9x8x16xbf16, #tpu.memory_space<vmem>>, vector<1x8x16xbf16>
    %43 = vector.shape_cast %42 : vector<1x8x16xbf16> to vector<8x16xbf16>
    %cst_28 = arith.constant dense<0.000000e+00> : vector<32x16xf32>
    %44 = tpu.matmul %41, %43, %cst_28 {dimension_numbers = #tpu.dot_dimension_numbers<[1], [0], [0], [1], [0, 0, 1, 1], [], []>} : vector<32x8xbf16>, vector<8x16xbf16>, vector<32x16xf32> -> vector<32x16xf32>
    %45 = arith.addf %40, %44 : vector<32x16xf32>
    %46 = vector.extract_strided_slice %16 {offsets = [192, 0], sizes = [32, 8], strides = [1, 1]} : vector<288x8xbf16> to vector<32x8xbf16>
    %c6 = arith.constant 6 : index
    %c0_29 = arith.constant 0 : index
    %c0_30 = arith.constant 0 : index
    %47 = vector.load %arg5[%c6, %c0_29, %c0_30] : memref<9x8x16xbf16, #tpu.memory_space<vmem>>, vector<1x8x16xbf16>
    %48 = vector.shape_cast %47 : vector<1x8x16xbf16> to vector<8x16xbf16>
    %cst_31 = arith.constant dense<0.000000e+00> : vector<32x16xf32>
    %49 = tpu.matmul %46, %48, %cst_31 {dimension_numbers = #tpu.dot_dimension_numbers<[1], [0], [0], [1], [0, 0, 1, 1], [], []>} : vector<32x8xbf16>, vector<8x16xbf16>, vector<32x16xf32> -> vector<32x16xf32>
    %50 = arith.addf %45, %49 : vector<32x16xf32>
    %51 = vector.extract_strided_slice %16 {offsets = [224, 0], sizes = [32, 8], strides = [1, 1]} : vector<288x8xbf16> to vector<32x8xbf16>
    %c7 = arith.constant 7 : index
    %c0_32 = arith.constant 0 : index
    %c0_33 = arith.constant 0 : index
    %52 = vector.load %arg5[%c7, %c0_32, %c0_33] : memref<9x8x16xbf16, #tpu.memory_space<vmem>>, vector<1x8x16xbf16>
    %53 = vector.shape_cast %52 : vector<1x8x16xbf16> to vector<8x16xbf16>
    %cst_34 = arith.constant dense<0.000000e+00> : vector<32x16xf32>
    %54 = tpu.matmul %51, %53, %cst_34 {dimension_numbers = #tpu.dot_dimension_numbers<[1], [0], [0], [1], [0, 0, 1, 1], [], []>} : vector<32x8xbf16>, vector<8x16xbf16>, vector<32x16xf32> -> vector<32x16xf32>
    %55 = arith.addf %50, %54 : vector<32x16xf32>
    %56 = vector.extract_strided_slice %16 {offsets = [256, 0], sizes = [32, 8], strides = [1, 1]} : vector<288x8xbf16> to vector<32x8xbf16>
    %c8 = arith.constant 8 : index
    %c0_35 = arith.constant 0 : index
    %c0_36 = arith.constant 0 : index
    %57 = vector.load %arg5[%c8, %c0_35, %c0_36] : memref<9x8x16xbf16, #tpu.memory_space<vmem>>, vector<1x8x16xbf16>
    %58 = vector.shape_cast %57 : vector<1x8x16xbf16> to vector<8x16xbf16>
    %cst_37 = arith.constant dense<0.000000e+00> : vector<32x16xf32>
    %59 = tpu.matmul %56, %58, %cst_37 {dimension_numbers = #tpu.dot_dimension_numbers<[1], [0], [0], [1], [0, 0, 1, 1], [], []>} : vector<32x8xbf16>, vector<8x16xbf16>, vector<32x16xf32> -> vector<32x16xf32>
    %60 = arith.addf %55, %59 : vector<32x16xf32>
    %c0_38 = arith.constant 0 : index
    %c0_39 = arith.constant 0 : index
    %61 = vector.load %arg6[%c0_38, %c0_39] : memref<1x16xf32, #tpu.memory_space<vmem>>, vector<1x16xf32>
    %62 = vector.broadcast %61 : vector<1x16xf32> to vector<32x16xf32>
    %63 = arith.addf %60, %62 : vector<32x16xf32>
    %cst_40 = arith.constant 0.000000e+00 : f32
    %64 = vector.broadcast %cst_40 : f32 to vector<32x16xf32>
    %65 = arith.subf %64, %63 : vector<32x16xf32>
    %66 = math.exp %65 : vector<32x16xf32>
    %cst_41 = arith.constant 1.000000e+00 : f32
    %67 = vector.broadcast %cst_41 : f32 to vector<32x16xf32>
    %68 = arith.addf %67, %66 : vector<32x16xf32>
    %69 = tpu.reciprocal %68 {approx = true} : vector<32x16xf32> -> vector<32x16xf32>
    %70 = arith.mulf %63, %69 : vector<32x16xf32>
    %71 = arith.truncf %70 : vector<32x16xf32> to vector<32x16xbf16>
    %c0_42 = arith.constant 0 : index
    %c0_43 = arith.constant 0 : index
    %72 = vector.load %arg7[%c0_42, %c0_43] : memref<16x16xbf16, #tpu.memory_space<vmem>>, vector<16x16xbf16>
    %cst_44 = arith.constant dense<0.000000e+00> : vector<32x16xf32>
    %73 = tpu.matmul %71, %72, %cst_44 {dimension_numbers = #tpu.dot_dimension_numbers<[1], [0], [0], [1], [0, 0, 1, 1], [], []>} : vector<32x16xbf16>, vector<16x16xbf16>, vector<32x16xf32> -> vector<32x16xf32>
    %c0_45 = arith.constant 0 : index
    %c0_46 = arith.constant 0 : index
    %74 = vector.load %arg8[%c0_45, %c0_46] : memref<1x16xf32, #tpu.memory_space<vmem>>, vector<1x16xf32>
    %75 = vector.broadcast %74 : vector<1x16xf32> to vector<32x16xf32>
    %76 = arith.addf %73, %75 : vector<32x16xf32>
    %cst_47 = arith.constant 0.000000e+00 : f32
    %77 = vector.broadcast %cst_47 : f32 to vector<32x16xf32>
    %78 = arith.subf %77, %76 : vector<32x16xf32>
    %79 = math.exp %78 : vector<32x16xf32>
    %cst_48 = arith.constant 1.000000e+00 : f32
    %80 = vector.broadcast %cst_48 : f32 to vector<32x16xf32>
    %81 = arith.addf %80, %79 : vector<32x16xf32>
    %82 = tpu.reciprocal %81 {approx = true} : vector<32x16xf32> -> vector<32x16xf32>
    %83 = arith.mulf %76, %82 : vector<32x16xf32>
    %84 = arith.truncf %83 : vector<32x16xf32> to vector<32x16xbf16>
    %c0_49 = arith.constant 0 : index
    %c0_50 = arith.constant 0 : index
    %85 = vector.load %arg9[%c0_49, %c0_50] : memref<288x32xbf16, #tpu.memory_space<vmem>>, vector<288x32xbf16>
    %cst_51 = arith.constant dense<0.000000e+00> : vector<288x16xf32>
    %86 = tpu.matmul %85, %84, %cst_51 {dimension_numbers = #tpu.dot_dimension_numbers<[1], [0], [0], [1], [0, 0, 1, 1], [], []>} : vector<288x32xbf16>, vector<32x16xbf16>, vector<288x16xf32> -> vector<288x16xf32>
    %87 = arith.truncf %86 : vector<288x16xf32> to vector<288x16xbf16>
    %88 = vector.extract_strided_slice %87 {offsets = [0, 0], sizes = [32, 16], strides = [1, 1]} : vector<288x16xbf16> to vector<32x16xbf16>
    %c0_52 = arith.constant 0 : index
    %c0_53 = arith.constant 0 : index
    %c0_54 = arith.constant 0 : index
    %89 = vector.load %arg10[%c0_52, %c0_53, %c0_54] : memref<9x16x32xbf16, #tpu.memory_space<vmem>>, vector<1x16x32xbf16>
    %90 = vector.shape_cast %89 : vector<1x16x32xbf16> to vector<16x32xbf16>
    %cst_55 = arith.constant dense<0.000000e+00> : vector<32x32xf32>
    %91 = tpu.matmul %88, %90, %cst_55 {dimension_numbers = #tpu.dot_dimension_numbers<[1], [0], [0], [1], [0, 0, 1, 1], [], []>} : vector<32x16xbf16>, vector<16x32xbf16>, vector<32x32xf32> -> vector<32x32xf32>
    %92 = vector.extract_strided_slice %87 {offsets = [32, 0], sizes = [32, 16], strides = [1, 1]} : vector<288x16xbf16> to vector<32x16xbf16>
    %c1_56 = arith.constant 1 : index
    %c0_57 = arith.constant 0 : index
    %c0_58 = arith.constant 0 : index
    %93 = vector.load %arg10[%c1_56, %c0_57, %c0_58] : memref<9x16x32xbf16, #tpu.memory_space<vmem>>, vector<1x16x32xbf16>
    %94 = vector.shape_cast %93 : vector<1x16x32xbf16> to vector<16x32xbf16>
    %cst_59 = arith.constant dense<0.000000e+00> : vector<32x32xf32>
    %95 = tpu.matmul %92, %94, %cst_59 {dimension_numbers = #tpu.dot_dimension_numbers<[1], [0], [0], [1], [0, 0, 1, 1], [], []>} : vector<32x16xbf16>, vector<16x32xbf16>, vector<32x32xf32> -> vector<32x32xf32>
    %96 = arith.addf %91, %95 : vector<32x32xf32>
    %97 = vector.extract_strided_slice %87 {offsets = [64, 0], sizes = [32, 16], strides = [1, 1]} : vector<288x16xbf16> to vector<32x16xbf16>
    %c2_60 = arith.constant 2 : index
    %c0_61 = arith.constant 0 : index
    %c0_62 = arith.constant 0 : index
    %98 = vector.load %arg10[%c2_60, %c0_61, %c0_62] : memref<9x16x32xbf16, #tpu.memory_space<vmem>>, vector<1x16x32xbf16>
    %99 = vector.shape_cast %98 : vector<1x16x32xbf16> to vector<16x32xbf16>
    %cst_63 = arith.constant dense<0.000000e+00> : vector<32x32xf32>
    %100 = tpu.matmul %97, %99, %cst_63 {dimension_numbers = #tpu.dot_dimension_numbers<[1], [0], [0], [1], [0, 0, 1, 1], [], []>} : vector<32x16xbf16>, vector<16x32xbf16>, vector<32x32xf32> -> vector<32x32xf32>
    %101 = arith.addf %96, %100 : vector<32x32xf32>
    %102 = vector.extract_strided_slice %87 {offsets = [96, 0], sizes = [32, 16], strides = [1, 1]} : vector<288x16xbf16> to vector<32x16xbf16>
    %c3_64 = arith.constant 3 : index
    %c0_65 = arith.constant 0 : index
    %c0_66 = arith.constant 0 : index
    %103 = vector.load %arg10[%c3_64, %c0_65, %c0_66] : memref<9x16x32xbf16, #tpu.memory_space<vmem>>, vector<1x16x32xbf16>
    %104 = vector.shape_cast %103 : vector<1x16x32xbf16> to vector<16x32xbf16>
    %cst_67 = arith.constant dense<0.000000e+00> : vector<32x32xf32>
    %105 = tpu.matmul %102, %104, %cst_67 {dimension_numbers = #tpu.dot_dimension_numbers<[1], [0], [0], [1], [0, 0, 1, 1], [], []>} : vector<32x16xbf16>, vector<16x32xbf16>, vector<32x32xf32> -> vector<32x32xf32>
    %106 = arith.addf %101, %105 : vector<32x32xf32>
    %107 = vector.extract_strided_slice %87 {offsets = [128, 0], sizes = [32, 16], strides = [1, 1]} : vector<288x16xbf16> to vector<32x16xbf16>
    %c4_68 = arith.constant 4 : index
    %c0_69 = arith.constant 0 : index
    %c0_70 = arith.constant 0 : index
    %108 = vector.load %arg10[%c4_68, %c0_69, %c0_70] : memref<9x16x32xbf16, #tpu.memory_space<vmem>>, vector<1x16x32xbf16>
    %109 = vector.shape_cast %108 : vector<1x16x32xbf16> to vector<16x32xbf16>
    %cst_71 = arith.constant dense<0.000000e+00> : vector<32x32xf32>
    %110 = tpu.matmul %107, %109, %cst_71 {dimension_numbers = #tpu.dot_dimension_numbers<[1], [0], [0], [1], [0, 0, 1, 1], [], []>} : vector<32x16xbf16>, vector<16x32xbf16>, vector<32x32xf32> -> vector<32x32xf32>
    %111 = arith.addf %106, %110 : vector<32x32xf32>
    %112 = vector.extract_strided_slice %87 {offsets = [160, 0], sizes = [32, 16], strides = [1, 1]} : vector<288x16xbf16> to vector<32x16xbf16>
    %c5_72 = arith.constant 5 : index
    %c0_73 = arith.constant 0 : index
    %c0_74 = arith.constant 0 : index
    %113 = vector.load %arg10[%c5_72, %c0_73, %c0_74] : memref<9x16x32xbf16, #tpu.memory_space<vmem>>, vector<1x16x32xbf16>
    %114 = vector.shape_cast %113 : vector<1x16x32xbf16> to vector<16x32xbf16>
    %cst_75 = arith.constant dense<0.000000e+00> : vector<32x32xf32>
    %115 = tpu.matmul %112, %114, %cst_75 {dimension_numbers = #tpu.dot_dimension_numbers<[1], [0], [0], [1], [0, 0, 1, 1], [], []>} : vector<32x16xbf16>, vector<16x32xbf16>, vector<32x32xf32> -> vector<32x32xf32>
    %116 = arith.addf %111, %115 : vector<32x32xf32>
    %117 = vector.extract_strided_slice %87 {offsets = [192, 0], sizes = [32, 16], strides = [1, 1]} : vector<288x16xbf16> to vector<32x16xbf16>
    %c6_76 = arith.constant 6 : index
    %c0_77 = arith.constant 0 : index
    %c0_78 = arith.constant 0 : index
    %118 = vector.load %arg10[%c6_76, %c0_77, %c0_78] : memref<9x16x32xbf16, #tpu.memory_space<vmem>>, vector<1x16x32xbf16>
    %119 = vector.shape_cast %118 : vector<1x16x32xbf16> to vector<16x32xbf16>
    %cst_79 = arith.constant dense<0.000000e+00> : vector<32x32xf32>
    %120 = tpu.matmul %117, %119, %cst_79 {dimension_numbers = #tpu.dot_dimension_numbers<[1], [0], [0], [1], [0, 0, 1, 1], [], []>} : vector<32x16xbf16>, vector<16x32xbf16>, vector<32x32xf32> -> vector<32x32xf32>
    %121 = arith.addf %116, %120 : vector<32x32xf32>
    %122 = vector.extract_strided_slice %87 {offsets = [224, 0], sizes = [32, 16], strides = [1, 1]} : vector<288x16xbf16> to vector<32x16xbf16>
    %c7_80 = arith.constant 7 : index
    %c0_81 = arith.constant 0 : index
    %c0_82 = arith.constant 0 : index
    %123 = vector.load %arg10[%c7_80, %c0_81, %c0_82] : memref<9x16x32xbf16, #tpu.memory_space<vmem>>, vector<1x16x32xbf16>
    %124 = vector.shape_cast %123 : vector<1x16x32xbf16> to vector<16x32xbf16>
    %cst_83 = arith.constant dense<0.000000e+00> : vector<32x32xf32>
    %125 = tpu.matmul %122, %124, %cst_83 {dimension_numbers = #tpu.dot_dimension_numbers<[1], [0], [0], [1], [0, 0, 1, 1], [], []>} : vector<32x16xbf16>, vector<16x32xbf16>, vector<32x32xf32> -> vector<32x32xf32>
    %126 = arith.addf %121, %125 : vector<32x32xf32>
    %127 = vector.extract_strided_slice %87 {offsets = [256, 0], sizes = [32, 16], strides = [1, 1]} : vector<288x16xbf16> to vector<32x16xbf16>
    %c8_84 = arith.constant 8 : index
    %c0_85 = arith.constant 0 : index
    %c0_86 = arith.constant 0 : index
    %128 = vector.load %arg10[%c8_84, %c0_85, %c0_86] : memref<9x16x32xbf16, #tpu.memory_space<vmem>>, vector<1x16x32xbf16>
    %129 = vector.shape_cast %128 : vector<1x16x32xbf16> to vector<16x32xbf16>
    %cst_87 = arith.constant dense<0.000000e+00> : vector<32x32xf32>
    %130 = tpu.matmul %127, %129, %cst_87 {dimension_numbers = #tpu.dot_dimension_numbers<[1], [0], [0], [1], [0, 0, 1, 1], [], []>} : vector<32x16xbf16>, vector<16x32xbf16>, vector<32x32xf32> -> vector<32x32xf32>
    %131 = arith.addf %126, %130 : vector<32x32xf32>
    %c0_88 = arith.constant 0 : index
    %c0_89 = arith.constant 0 : index
    %132 = vector.load %arg11[%c0_88, %c0_89] : memref<1x32xf32, #tpu.memory_space<vmem>>, vector<1x32xf32>
    %133 = vector.broadcast %132 : vector<1x32xf32> to vector<32x32xf32>
    %134 = arith.addf %131, %133 : vector<32x32xf32>
    %cst_90 = arith.constant 0.000000e+00 : f32
    %135 = vector.broadcast %cst_90 : f32 to vector<32x32xf32>
    %136 = arith.subf %135, %134 : vector<32x32xf32>
    %137 = math.exp %136 : vector<32x32xf32>
    %cst_91 = arith.constant 1.000000e+00 : f32
    %138 = vector.broadcast %cst_91 : f32 to vector<32x32xf32>
    %139 = arith.addf %138, %137 : vector<32x32xf32>
    %140 = tpu.reciprocal %139 {approx = true} : vector<32x32xf32> -> vector<32x32xf32>
    %141 = arith.mulf %134, %140 : vector<32x32xf32>
    %142 = arith.truncf %141 : vector<32x32xf32> to vector<32x32xbf16>
    %c0_92 = arith.constant 0 : index
    %c0_93 = arith.constant 0 : index
    %143 = vector.load %arg12[%c0_92, %c0_93] : memref<32x9xbf16, #tpu.memory_space<vmem>>, vector<32x9xbf16>
    %cst_94 = arith.constant dense<0.000000e+00> : vector<32x9xf32>
    %144 = tpu.matmul %142, %143, %cst_94 {dimension_numbers = #tpu.dot_dimension_numbers<[1], [0], [0], [1], [0, 0, 1, 1], [], []>} : vector<32x32xbf16>, vector<32x9xbf16>, vector<32x9xf32> -> vector<32x9xf32>
    %c0_95 = arith.constant 0 : index
    %c0_96 = arith.constant 0 : index
    %145 = vector.load %arg13[%c0_95, %c0_96] : memref<1x9xf32, #tpu.memory_space<vmem>>, vector<1x9xf32>
    %146 = vector.broadcast %145 : vector<1x9xf32> to vector<32x9xf32>
    %147 = arith.addf %144, %146 : vector<32x9xf32>
    %148 = tpu.iota {dimensions = array<i32: 1>} : vector<32x9xi32>
    %c4_i32 = arith.constant 4 : i32
    %149 = vector.broadcast %c4_i32 : i32 to vector<32x9xi32>
    %150 = arith.cmpi sge, %148, %149 : vector<32x9xi32>
    %cst_97 = arith.constant 0.000000e+00 : f32
    %151 = vector.broadcast %cst_97 : f32 to vector<32x9xf32>
    %152 = arith.subf %151, %147 : vector<32x9xf32>
    %153 = math.exp %152 : vector<32x9xf32>
    %cst_98 = arith.constant 1.000000e+00 : f32
    %154 = vector.broadcast %cst_98 : f32 to vector<32x9xf32>
    %155 = arith.addf %154, %153 : vector<32x9xf32>
    %156 = tpu.reciprocal %155 {approx = true} : vector<32x9xf32> -> vector<32x9xf32>
    %157 = arith.select %150, %156, %147 : vector<32x9xi1>, vector<32x9xf32>
    %c0_99 = arith.constant 0 : index
    %c0_100 = arith.constant 0 : index
    %158 = vector.load %arg14[%c0_99, %c0_100] : memref<32x9xf32, #tpu.memory_space<vmem>>, vector<32x9xf32>
    tpu.vector_store %arg14[%c0_99, %c0_100], %157 {strides = array<i32>} : memref<32x9xf32, #tpu.memory_space<vmem>>, vector<32x9xf32>,
    return
  }
  func.func @transform_0(%arg0: i32) -> (i32, i32) {
    %c0_i32 = arith.constant 0 : i32
    %c0_i32_0 = arith.constant 0 : i32
    %c0_i32_1 = arith.constant 0 : i32
    return %c0_i32, %c0_i32_0 : i32, i32
  }
  func.func @transform_1(%arg0: i32) -> (i32, i32) {
    %c0_i32 = arith.constant 0 : i32
    %c0_i32_0 = arith.constant 0 : i32
    %c0_i32_1 = arith.constant 0 : i32
    return %c0_i32, %c0_i32_0 : i32, i32
  }
  func.func @transform_2(%arg0: i32) -> (i32, i32) {
    %c0_i32 = arith.constant 0 : i32
    %c0_i32_0 = arith.constant 0 : i32
    %c0_i32_1 = arith.constant 0 : i32
    return %c0_i32, %c0_i32_0 : i32, i32
  }
  func.func @transform_3(%arg0: i32) -> (i32, i32) {
    %c0_i32 = arith.constant 0 : i32
    %c0_i32_0 = arith.constant 0 : i32
    %c0_i32_1 = arith.constant 0 : i32
    return %c0_i32, %c0_i32_0 : i32, i32
  }
  func.func @transform_4(%arg0: i32) -> (i32, i32, i32) {
    %c0_i32 = arith.constant 0 : i32
    %c0_i32_0 = arith.constant 0 : i32
    %c0_i32_1 = arith.constant 0 : i32
    %c0_i32_2 = arith.constant 0 : i32
    return %c0_i32, %c0_i32_0, %c0_i32_1 : i32, i32, i32
  }
  func.func @transform_5(%arg0: i32) -> (i32, i32) {
    %c0_i32 = arith.constant 0 : i32
    %c0_i32_0 = arith.constant 0 : i32
    %c0_i32_1 = arith.constant 0 : i32
    return %c0_i32, %c0_i32_0 : i32, i32
  }
  func.func @transform_6(%arg0: i32) -> (i32, i32) {
    %c0_i32 = arith.constant 0 : i32
    %c0_i32_0 = arith.constant 0 : i32
    %c0_i32_1 = arith.constant 0 : i32
    return %c0_i32, %c0_i32_0 : i32, i32
  }
  func.func @transform_7(%arg0: i32) -> (i32, i32) {
    %c0_i32 = arith.constant 0 : i32
    %c0_i32_0 = arith.constant 0 : i32
    %c0_i32_1 = arith.constant 0 : i32
    return %c0_i32, %c0_i32_0 : i32, i32
  }
  func.func @transform_8(%arg0: i32) -> (i32, i32) {
    %c0_i32 = arith.constant 0 : i32
    %c0_i32_0 = arith.constant 0 : i32
    %c0_i32_1 = arith.constant 0 : i32
    return %c0_i32, %c0_i32_0 : i32, i32
  }
  func.func @transform_9(%arg0: i32) -> (i32, i32, i32) {
    %c0_i32 = arith.constant 0 : i32
    %c0_i32_0 = arith.constant 0 : i32
    %c0_i32_1 = arith.constant 0 : i32
    %c0_i32_2 = arith.constant 0 : i32
    return %c0_i32, %c0_i32_0, %c0_i32_1 : i32, i32, i32
  }
  func.func @transform_10(%arg0: i32) -> (i32, i32) {
    %c0_i32 = arith.constant 0 : i32
    %c0_i32_0 = arith.constant 0 : i32
    %c0_i32_1 = arith.constant 0 : i32
    return %c0_i32, %c0_i32_0 : i32, i32
  }
  func.func @transform_11(%arg0: i32) -> (i32, i32) {
    %c0_i32 = arith.constant 0 : i32
    %c0_i32_0 = arith.constant 0 : i32
    %c0_i32_1 = arith.constant 0 : i32
    return %c0_i32, %c0_i32_0 : i32, i32
  }
  func.func @transform_12(%arg0: i32) -> (i32, i32) {
    %c0_i32 = arith.constant 0 : i32
    %c0_i32_0 = arith.constant 0 : i32
    %c0_i32_1 = arith.constant 0 : i32
    return %c0_i32, %c0_i32_0 : i32, i32
  }
  func.func @transform_13(%arg0: i32) -> (i32, i32) {
    %c0_i32 = arith.constant 0 : i32
    %c0_i32_0 = arith.constant 0 : i32
    %c0_i32_1 = arith.constant 0 : i32
    return %c0_i32, %c0_i32_0 : i32, i32
  }
}

</mosaic_0001>

<llo_original>
// kernel: yolox_deploy_forward.1
$region0: #{yolox_deploy_forward.1}
  #allocation0 [shape = 'u32[]', space=smem, size = 0x4, offset = 0x4, fixed_abs, tag = 'smem constant byte address 0x4 - core index']
  #allocation1 [shape = 'u32[144,128]{1,0:T(1,128)}', space=vmem, size = 0x12000, scoped, tag = 'internal scratch']
  %s0 = inlined_call_operand.vmem [shape: bf16[128,128], index: 0, kind: input, shape index: {}]
  %s1 = inlined_call_operand.vmem [shape: bf16[128,8], index: 1, kind: input, shape index: {}]
  %s2 = inlined_call_operand.vmem [shape: f32[1,8], index: 2, kind: input, shape index: {}]
  %s3 = inlined_call_operand.vmem [shape: bf16[288,128], index: 3, kind: input, shape index: {}]
  %s4 = inlined_call_operand.vmem [shape: bf16[9,8,16], index: 4, kind: input, shape index: {}]
  %s5 = inlined_call_operand.vmem [shape: f32[1,16], index: 5, kind: input, shape index: {}]
  %s6 = inlined_call_operand.vmem [shape: bf16[16,16], index: 6, kind: input, shape index: {}]
  %s7 = inlined_call_operand.vmem [shape: f32[1,16], index: 7, kind: input, shape index: {}]
  %s8 = inlined_call_operand.vmem [shape: bf16[288,32], index: 8, kind: input, shape index: {}]
  %s9 = inlined_call_operand.vmem [shape: bf16[9,16,32], index: 9, kind: input, shape index: {}]
  %s10 = inlined_call_operand.vmem [shape: f32[1,32], index: 10, kind: input, shape index: {}]
  %s11 = inlined_call_operand.vmem [shape: bf16[32,9], index: 11, kind: input, shape index: {}]
  %s12 = inlined_call_operand.vmem [shape: f32[1,9], index: 12, kind: input, shape index: {}]
  %s13 = inlined_call_operand.vmem [shape: f32[32,9], index: 13, kind: output, shape index: {}]
  %s14 = sld [smem:[#allocation0]]
  $region62: #{yolox_deploy_forward.1} parent=0
    _
  %s16 = ssub.s32 1, %s14
  %s17 = scalar_select 0, %s16, %s14
  // Predicated region
  $region2: #{yolox_deploy_forward.1} parent=0 // pred_check
    _
  $region3: #{yolox_deploy_forward.1} parent=0 // pred_check_branch
    %19 = sbr.rel (0) target = $region5
  $region4: #{yolox_deploy_forward.1} parent=0 // pred_region
    _
  $region5: #{yolox_deploy_forward.1} parent=0 // pred_fallthru
    _
  // Predicated region
  $region6: #{yolox_deploy_forward.1} parent=0 // pred_check
    _
  $region7: #{yolox_deploy_forward.1} parent=0 // pred_check_branch
    %21 = sbr.rel (0) target = $region9
  $region8: #{yolox_deploy_forward.1} parent=0 // pred_region
    _
  $region9: #{yolox_deploy_forward.1} parent=0 // pred_fallthru
    _
  // Predicated region
  $region10: #{yolox_deploy_forward.1} parent=0 // pred_check
    _
  $region11: #{yolox_deploy_forward.1} parent=0 // pred_check_branch
    %23 = sbr.rel (0) target = $region13
  $region12: #{yolox_deploy_forward.1} parent=0 // pred_region
    _
  $region13: #{yolox_deploy_forward.1} parent=0 // pred_fallthru
    _
  // Predicated region
  $region14: #{yolox_deploy_forward.1} parent=0 // pred_check
    _
  $region15: #{yolox_deploy_forward.1} parent=0 // pred_check_branch
    %25 = sbr.rel (0) target = $region17
  $region16: #{yolox_deploy_forward.1} parent=0 // pred_region
    _
  $region17: #{yolox_deploy_forward.1} parent=0 // pred_fallthru
    _
  // Predicated region
  $region18: #{yolox_deploy_forward.1} parent=0 // pred_check
    _
  $region19: #{yolox_deploy_forward.1} parent=0 // pred_check_branch
    %27 = sbr.rel (0) target = $region21
  $region20: #{yolox_deploy_forward.1} parent=0 // pred_region
    _
  $region21: #{yolox_deploy_forward.1} parent=0 // pred_fallthru
    _
  // Predicated region
  $region22: #{yolox_deploy_forward.1} parent=0 // pred_check
    _
  $region23: #{yolox_deploy_forward.1} parent=0 // pred_check_branch
    %29 = sbr.rel (0) target = $region25
  $region24: #{yolox_deploy_forward.1} parent=0 // pred_region
    _
  $region25: #{yolox_deploy_forward.1} parent=0 // pred_fallthru
    _
  // Predicated region
  $region26: #{yolox_deploy_forward.1} parent=0 // pred_check
    _
  $region27: #{yolox_deploy_forward.1} parent=0 // pred_check_branch
    %31 = sbr.rel (0) target = $region29
  $region28: #{yolox_deploy_forward.1} parent=0 // pred_region
    _
  $region29: #{yolox_deploy_forward.1} parent=0 // pred_fallthru
    _
  // Predicated region
  $region30: #{yolox_deploy_forward.1} parent=0 // pred_check
    _
  $region31: #{yolox_deploy_forward.1} parent=0 // pred_check_branch
    %33 = sbr.rel (0) target = $region33
  $region32: #{yolox_deploy_forward.1} parent=0 // pred_region
    _
  $region33: #{yolox_deploy_forward.1} parent=0 // pred_fallthru
    _
  // Predicated region
  $region34: #{yolox_deploy_forward.1} parent=0 // pred_check
    _
  $region35: #{yolox_deploy_forward.1} parent=0 // pred_check_branch
    %35 = sbr.rel (0) target = $region37
  $region36: #{yolox_deploy_forward.1} parent=0 // pred_region
    _
  $region37: #{yolox_deploy_forward.1} parent=0 // pred_fallthru
    _
  // Predicated region
  $region38: #{yolox_deploy_forward.1} parent=0 // pred_check
    _
  $region39: #{yolox_deploy_forward.1} parent=0 // pred_check_branch
    %37 = sbr.rel (0) target = $region41
  $region40: #{yolox_deploy_forward.1} parent=0 // pred_region
    _
  $region41: #{yolox_deploy_forward.1} parent=0 // pred_fallthru
    _
  // Predicated region
  $region42: #{yolox_deploy_forward.1} parent=0 // pred_check
    _
  $region43: #{yolox_deploy_forward.1} parent=0 // pred_check_branch
    %39 = sbr.rel (0) target = $region45
  $region44: #{yolox_deploy_forward.1} parent=0 // pred_region
    _
  $region45: #{yolox_deploy_forward.1} parent=0 // pred_fallthru
    _
  // Predicated region
  $region46: #{yolox_deploy_forward.1} parent=0 // pred_check
    _
  $region47: #{yolox_deploy_forward.1} parent=0 // pred_check_branch
    %41 = sbr.rel (0) target = $region49
  $region48: #{yolox_deploy_forward.1} parent=0 // pred_region
    _
  $region49: #{yolox_deploy_forward.1} parent=0 // pred_fallthru
    _
  // Predicated region
  $region50: #{yolox_deploy_forward.1} parent=0 // pred_check
    _
  $region51: #{yolox_deploy_forward.1} parent=0 // pred_check_branch
    %43 = sbr.rel (0) target = $region53
  $region52: #{yolox_deploy_forward.1} parent=0 // pred_region
    _
  $region53: #{yolox_deploy_forward.1} parent=0 // pred_fallthru
    _
  %v45 = vld [vmem:[%s0] sm:$0xf]
  %v46 = vld [vmem:[%s0 + $0x4] sm:$0xf]
  %v47 = vld [vmem:[%s0 + $0x8] sm:$0xf]
  %v48 = vld [vmem:[%s0 + $0xc] sm:$0xf]
  %v49 = vld [vmem:[%s0 + $0x10] sm:$0xf]
  %v50 = vld [vmem:[%s0 + $0x14] sm:$0xf]
  %v51 = vld [vmem:[%s0 + $0x18] sm:$0xf]
  %v52 = vld [vmem:[%s0 + $0x1c] sm:$0xf]
  %v53 = vld [vmem:[%s0 + $0x20] sm:$0xf]
  %v54 = vld [vmem:[%s0 + $0x24] sm:$0xf]
  %v55 = vld [vmem:[%s0 + $0x28] sm:$0xf]
  %v56 = vld [vmem:[%s0 + $0x2c] sm:$0xf]
  %v57 = vld [vmem:[%s0 + $0x30] sm:$0xf]
  %v58 = vld [vmem:[%s0 + $0x34] sm:$0xf]
  %v59 = vld [vmem:[%s0 + $0x38] sm:$0xf]
  %v60 = vld [vmem:[%s0 + $0x3c] sm:$0xf]
  %v61 = vld [vmem:[%s1] sm:$0xf]
  %v62 = vld [vmem:[%s1 + $0x4] sm:$0xf]
  %v63 = vld [vmem:[%s1 + $0x8] sm:$0xf]
  %v64 = vld [vmem:[%s1 + $0xc] sm:$0xf]
  %v65 = vld [vmem:[%s1 + $0x10] sm:$0xf]
  %v66 = vld [vmem:[%s1 + $0x14] sm:$0xf]
  %v67 = vld [vmem:[%s1 + $0x18] sm:$0xf]
  %v68 = vld [vmem:[%s1 + $0x1c] sm:$0xf]
  %v69 = vld [vmem:[%s1 + $0x20] sm:$0xf]
  %v70 = vld [vmem:[%s1 + $0x24] sm:$0xf]
  %v71 = vld [vmem:[%s1 + $0x28] sm:$0xf]
  %v72 = vld [vmem:[%s1 + $0x2c] sm:$0xf]
  %v73 = vld [vmem:[%s1 + $0x30] sm:$0xf]
  %v74 = vld [vmem:[%s1 + $0x34] sm:$0xf]
  %v75 = vld [vmem:[%s1 + $0x38] sm:$0xf]
  %v76 = vld [vmem:[%s1 + $0x3c] sm:$0xf]
  %v77 = vld [vmem:[%s2] sm:$0x1]
  %v79 = vlaneseq
  %v80 = vshrl.u32 %v79, 7
  %v81 = vsub.s32 0, %v80
  %v82 = vrot.slane %v77, %v81
  %v100 = vunpack.c.l.b16 %v45
  %v101 = vunpack.c.l.b16 %v46
  %v102 = vunpack.c.l.b16 %v47
  %v103 = vunpack.c.l.b16 %v48
  %v104 = vunpack.c.l.b16 %v49
  %v105 = vunpack.c.l.b16 %v50
  %v106 = vunpack.c.l.b16 %v51
  %v107 = vunpack.c.l.b16 %v52
  %v108 = vunpack.c.l.b16 %v53
  %v109 = vunpack.c.l.b16 %v54
  %v110 = vunpack.c.l.b16 %v55
  %v111 = vunpack.c.l.b16 %v56
  %v112 = vunpack.c.l.b16 %v57
  %v113 = vunpack.c.l.b16 %v58
  %v114 = vunpack.c.l.b16 %v59
  %v115 = vunpack.c.l.b16 %v60
  %v116 = vpack.c.b16 %v101, %v100
  %v117 = vpack.c.b16 %v103, %v102
  %v118 = vpack.c.b16 %v105, %v104
  %v119 = vpack.c.b16 %v107, %v106
  %v120 = vpack.c.b16 %v109, %v108
  %v121 = vpack.c.b16 %v111, %v110
  %v122 = vpack.c.b16 %v113, %v112
  %v123 = vpack.c.b16 %v115, %v114
  %v148 = vunpack.c.l.b16 %v61
  %v149 = vunpack.c.l.b16 %v62
  %v150 = vunpack.c.l.b16 %v63
  %v151 = vunpack.c.l.b16 %v64
  %v152 = vunpack.c.l.b16 %v65
  %v153 = vunpack.c.l.b16 %v66
  %v154 = vunpack.c.l.b16 %v67
  %v155 = vunpack.c.l.b16 %v68
  %v156 = vunpack.c.l.b16 %v69
  %v157 = vunpack.c.l.b16 %v70
  %v158 = vunpack.c.l.b16 %v71
  %v159 = vunpack.c.l.b16 %v72
  %v160 = vunpack.c.l.b16 %v73
  %v161 = vunpack.c.l.b16 %v74
  %v162 = vunpack.c.l.b16 %v75
  %v163 = vunpack.c.l.b16 %v76
  %v164 = vpack.c.b16 %v149, %v148
  %v165 = vpack.c.b16 %v151, %v150
  %v166 = vpack.c.b16 %v153, %v152
  %v167 = vpack.c.b16 %v155, %v154
  %v168 = vpack.c.b16 %v157, %v156
  %v169 = vpack.c.b16 %v159, %v158
  %v170 = vpack.c.b16 %v161, %v160
  %v171 = vpack.c.b16 %v163, %v162
  %180 = vmatprep.subr.bf16.mxu0 0
  %181 = vmatpush1.bf16.msra.mxu0 %v164
  %182 = vmatprep.subr.bf16.mxu0 0
  %183 = vmatpush1.bf16.msra.mxu0 %v165
  %184 = vmatprep.subr.bf16.mxu0 0
  %185 = vmatpush1.bf16.msra.mxu0 %v166
  %186 = vmatprep.subr.bf16.mxu0 0
  %187 = vmatpush1.bf16.msra.mxu0 %v167
  %188 = vmatprep.subr.bf16.mxu0 0
  %189 = vmatpush1.bf16.msra.mxu0 %v168
  %190 = vmatprep.subr.bf16.mxu0 0
  %191 = vmatpush1.bf16.msra.mxu0 %v169
  %192 = vmatprep.subr.bf16.mxu0 0
  %193 = vmatpush1.bf16.msra.mxu0 %v170
  %194 = vmatprep.subr.bf16.mxu0 0
  %195 = vmatpush1.bf16.msra.mxu0 %v171
  %196 = vmatprep.subr.bf16.mxu0 0
  %197 = vmatpush1.bf16.msra.mxu0 0
  %198 = vmatprep.subr.bf16.mxu0 0
  %199 = vmatpush1.bf16.msra.mxu0 0
  %200 = vmatprep.subr.bf16.mxu0 0
  %201 = vmatpush1.bf16.msra.mxu0 0
  %202 = vmatprep.subr.bf16.mxu0 0
  %203 = vmatpush1.bf16.msra.mxu0 0
  %204 = vmatprep.subr.bf16.mxu0 0
  %205 = vmatpush1.bf16.msra.mxu0 0
  %206 = vmatprep.subr.bf16.mxu0 0
  %207 = vmatpush1.bf16.msra.mxu0 0
  %208 = vmatprep.subr.bf16.mxu0 0
  %209 = vmatpush1.bf16.msra.mxu0 0
  %210 = vmatprep.subr.bf16.mxu0 0
  %211 = vmatpush1.bf16.msra.mxu0 0
  %212 = vmatprep.mubr.bf16.mxu0 0
  %213 = vmatmul.mubr.bf16.gmra.mrb[0].mxu0 %v116
  %v214 = vpop.f32.mrb[0].mxu0
  %v215 = vadd.f32 %v82, %v214
  %v216 = vpop.f32.mrb[0].mxu0
  %v217 = vpop.f32.mrb[0].mxu0
  %v218 = vadd.f32 %v82, %v217
  %v219 = vpop.f32.mrb[0].mxu0
  %220 = vmatprep.mubr.bf16.mxu0 0
  %221 = vmatmul.mubr.bf16.gmra.mrb[0].mxu0 %v117
  %v222 = vpop.f32.mrb[0].mxu0
  %v223 = vadd.f32 %v82, %v222
  %v224 = vpop.f32.mrb[0].mxu0
  %v225 = vpop.f32.mrb[0].mxu0
  %v226 = vadd.f32 %v82, %v225
  %v227 = vpop.f32.mrb[0].mxu0
  %228 = vmatprep.mubr.bf16.mxu0 0
  %229 = vmatmul.mubr.bf16.gmra.mrb[0].mxu0 %v118
  %v230 = vpop.f32.mrb[0].mxu0
  %v231 = vadd.f32 %v82, %v230
  %v232 = vpop.f32.mrb[0].mxu0
  %v233 = vpop.f32.mrb[0].mxu0
  %v234 = vadd.f32 %v82, %v233
  %v235 = vpop.f32.mrb[0].mxu0
  %236 = vmatprep.mubr.bf16.mxu0 0
  %237 = vmatmul.mubr.bf16.gmra.mrb[0].mxu0 %v119
  %v238 = vpop.f32.mrb[0].mxu0
  %v239 = vadd.f32 %v82, %v238
  %v240 = vpop.f32.mrb[0].mxu0
  %v241 = vpop.f32.mrb[0].mxu0
  %v242 = vadd.f32 %v82, %v241
  %v243 = vpop.f32.mrb[0].mxu0
  %244 = vmatprep.mubr.bf16.mxu0 0
  %245 = vmatmul.mubr.bf16.gmra.mrb[0].mxu0 %v120
  %v246 = vpop.f32.mrb[0].mxu0
  %v247 = vadd.f32 %v82, %v246
  %v248 = vpop.f32.mrb[0].mxu0
  %v249 = vpop.f32.mrb[0].mxu0
  %v250 = vadd.f32 %v82, %v249
  %v251 = vpop.f32.mrb[0].mxu0
  %252 = vmatprep.mubr.bf16.mxu0 0
  %253 = vmatmul.mubr.bf16.gmra.mrb[0].mxu0 %v121
  %v254 = vpop.f32.mrb[0].mxu0
  %v255 = vadd.f32 %v82, %v254
  %v256 = vpop.f32.mrb[0].mxu0
  %v257 = vpop.f32.mrb[0].mxu0
  %v258 = vadd.f32 %v82, %v257
  %v259 = vpop.f32.mrb[0].mxu0
  %260 = vmatprep.mubr.bf16.mxu0 0
  %261 = vmatmul.mubr.bf16.gmra.mrb[0].mxu0 %v122
  %v262 = vpop.f32.mrb[0].mxu0
  %v263 = vadd.f32 %v82, %v262
  %v264 = vpop.f32.mrb[0].mxu0
  %v265 = vpop.f32.mrb[0].mxu0
  %v266 = vadd.f32 %v82, %v265
  %v267 = vpop.f32.mrb[0].mxu0
  %268 = vmatprep.mubr.bf16.mxu0 0
  %269 = vmatmul.mubr.bf16.gmra.mrb[0].mxu0 %v123
  %v270 = vpop.f32.mrb[0].mxu0
  %v271 = vadd.f32 %v82, %v270
  %v272 = vpop.f32.mrb[0].mxu0
  %v273 = vpop.f32.mrb[0].mxu0
  %v274 = vadd.f32 %v82, %v273
  %v275 = vpop.f32.mrb[0].mxu0
  %276 = vdwg.mxu0
  %v277 = vsub.f32 0.0, %v215
  %v278 = vsub.f32 0.0, %v218
  %v279 = vsub.f32 0.0, %v223
  %v280 = vsub.f32 0.0, %v226
  %v281 = vsub.f32 0.0, %v231
  %v282 = vsub.f32 0.0, %v234
  %v283 = vsub.f32 0.0, %v239
  %v284 = vsub.f32 0.0, %v242
  %v285 = vsub.f32 0.0, %v247
  %v286 = vsub.f32 0.0, %v250
  %v287 = vsub.f32 0.0, %v255
  %v288 = vsub.f32 0.0, %v258
  %v289 = vsub.f32 0.0, %v263
  %v290 = vsub.f32 0.0, %v266
  %v291 = vsub.f32 0.0, %v271
  %v292 = vsub.f32 0.0, %v274
  %v293 = vmul.f32 %v277, 1.442695
  %v294 = vpow.pop %v293
  %v295 = vmul.f32 %v278, 1.442695
  %v296 = vpow.pop %v295
  %v297 = vmul.f32 %v279, 1.442695
  %v298 = vpow.pop %v297
  %v299 = vmul.f32 %v280, 1.442695
  %v300 = vpow.pop %v299
  %v301 = vmul.f32 %v281, 1.442695
  %v302 = vpow.pop %v301
  %v303 = vmul.f32 %v282, 1.442695
  %v304 = vpow.pop %v303
  %v305 = vmul.f32 %v283, 1.442695
  %v306 = vpow.pop %v305
  %v307 = vmul.f32 %v284, 1.442695
  %v308 = vpow.pop %v307
  %v309 = vmul.f32 %v285, 1.442695
  %v310 = vpow.pop %v309
  %v311 = vmul.f32 %v286, 1.442695
  %v312 = vpow.pop %v311
  %v313 = vmul.f32 %v287, 1.442695
  %v314 = vpow.pop %v313
  %v315 = vmul.f32 %v288, 1.442695
  %v316 = vpow.pop %v315
  %v317 = vmul.f32 %v289, 1.442695
  %v318 = vpow.pop %v317
  %v319 = vmul.f32 %v290, 1.442695
  %v320 = vpow.pop %v319
  %v321 = vmul.f32 %v291, 1.442695
  %v322 = vpow.pop %v321
  %v323 = vmul.f32 %v292, 1.442695
  %v324 = vpow.pop %v323
  %v325 = vadd.f32 %v294, 1.0
  %v326 = vadd.f32 %v296, 1.0
  %v327 = vadd.f32 %v298, 1.0
  %v328 = vadd.f32 %v300, 1.0
  %v329 = vadd.f32 %v302, 1.0
  %v330 = vadd.f32 %v304, 1.0
  %v331 = vadd.f32 %v306, 1.0
  %v332 = vadd.f32 %v308, 1.0
  %v333 = vadd.f32 %v310, 1.0
  %v334 = vadd.f32 %v312, 1.0
  %v335 = vadd.f32 %v314, 1.0
  %v336 = vadd.f32 %v316, 1.0
  %v337 = vadd.f32 %v318, 1.0
  %v338 = vadd.f32 %v320, 1.0
  %v339 = vadd.f32 %v322, 1.0
  %v340 = vadd.f32 %v324, 1.0
  %v341 = vrcp.pop %v325
  %v342 = vrcp.pop %v326
  %v343 = vrcp.pop %v327
  %v344 = vrcp.pop %v328
  %v345 = vrcp.pop %v329
  %v346 = vrcp.pop %v330
  %v347 = vrcp.pop %v331
  %v348 = vrcp.pop %v332
  %v349 = vrcp.pop %v333
  %v350 = vrcp.pop %v334
  %v351 = vrcp.pop %v335
  %v352 = vrcp.pop %v336
  %v353 = vrcp.pop %v337
  %v354 = vrcp.pop %v338
  %v355 = vrcp.pop %v339
  %v356 = vrcp.pop %v340
  %v357 = vmul.f32 %v215, %v341
  %v358 = vmul.f32 %v218, %v342
  %v359 = vmul.f32 %v223, %v343
  %v360 = vmul.f32 %v226, %v344
  %v361 = vmul.f32 %v231, %v345
  %v362 = vmul.f32 %v234, %v346
  %v363 = vmul.f32 %v239, %v347
  %v364 = vmul.f32 %v242, %v348
  %v365 = vmul.f32 %v247, %v349
  %v366 = vmul.f32 %v250, %v350
  %v367 = vmul.f32 %v255, %v351
  %v368 = vmul.f32 %v258, %v352
  %v369 = vmul.f32 %v263, %v353
  %v370 = vmul.f32 %v266, %v354
  %v371 = vmul.f32 %v271, %v355
  %v372 = vmul.f32 %v274, %v356
  %v373 = vpack.c.bf16 %v358, %v357
  %v374 = vpack.c.bf16 %v360, %v359
  %v375 = vpack.c.bf16 %v362, %v361
  %v376 = vpack.c.bf16 %v364, %v363
  %v377 = vpack.c.bf16 %v366, %v365
  %v378 = vpack.c.bf16 %v368, %v367
  %v379 = vpack.c.bf16 %v370, %v369
  %v380 = vpack.c.bf16 %v372, %v371
  %v381 = vld [vmem:[%s3] sm:$0xf]
  %v382 = vld [vmem:[%s3 + $0x4] sm:$0xf]
  %v383 = vld [vmem:[%s3 + $0x8] sm:$0xf]
  %v384 = vld [vmem:[%s3 + $0xc] sm:$0xf]
  %v385 = vld [vmem:[%s3 + $0x10] sm:$0xf]
  %v386 = vld [vmem:[%s3 + $0x14] sm:$0xf]
  %v387 = vld [vmem:[%s3 + $0x18] sm:$0xf]
  %v388 = vld [vmem:[%s3 + $0x1c] sm:$0xf]
  %v389 = vld [vmem:[%s3 + $0x20] sm:$0xf]
  %v390 = vld [vmem:[%s3 + $0x24] sm:$0xf]
  %v391 = vld [vmem:[%s3 + $0x28] sm:$0xf]
  %v392 = vld [vmem:[%s3 + $0x2c] sm:$0xf]
  %v393 = vld [vmem:[%s3 + $0x30] sm:$0xf]
  %v394 = vld [vmem:[%s3 + $0x34] sm:$0xf]
  %v395 = vld [vmem:[%s3 + $0x38] sm:$0xf]
  %v396 = vld [vmem:[%s3 + $0x3c] sm:$0xf]
  %v397 = vld [vmem:[%s3 + $0x40] sm:$0xf]
  %v398 = vld [vmem:[%s3 + $0x44] sm:$0xf]
  %v399 = vld [vmem:[%s3 + $0x48] sm:$0xf]
  %v400 = vld [vmem:[%s3 + $0x4c] sm:$0xf]
  %v401 = vld [vmem:[%s3 + $0x50] sm:$0xf]
  %v402 = vld [vmem:[%s3 + $0x54] sm:$0xf]
  %v403 = vld [vmem:[%s3 + $0x58] sm:$0xf]
  %v404 = vld [vmem:[%s3 + $0x5c] sm:$0xf]
  %v405 = vld [vmem:[%s3 + $0x60] sm:$0xf]
  %v406 = vld [vmem:[%s3 + $0x64] sm:$0xf]
  %v407 = vld [vmem:[%s3 + $0x68] sm:$0xf]
  %v408 = vld [vmem:[%s3 + $0x6c] sm:$0xf]
  %v409 = vld [vmem:[%s3 + $0x70] sm:$0xf]
  %v410 = vld [vmem:[%s3 + $0x74] sm:$0xf]
  %v411 = vld [vmem:[%s3 + $0x78] sm:$0xf]
  %v412 = vld [vmem:[%s3 + $0x7c] sm:$0xf]
  %v413 = vld [vmem:[%s3 + $0x80] sm:$0xf]
  %v414 = vld [vmem:[%s3 + $0x84] sm:$0xf]
  %v415 = vld [vmem:[%s3 + $0x88] sm:$0xf]
  %v416 = vld [vmem:[%s3 + $0x8c] sm:$0xf]
  %v453 = vunpack.c.l.b16 %v381
  %v454 = vunpack.c.l.b16 %v382
  %v455 = vunpack.c.l.b16 %v383
  %v456 = vunpack.c.l.b16 %v384
  %v457 = vunpack.c.l.b16 %v385
  %v458 = vunpack.c.l.b16 %v386
  %v459 = vunpack.c.l.b16 %v387
  %v460 = vunpack.c.l.b16 %v388
  %v461 = vunpack.c.l.b16 %v389
  %v462 = vunpack.c.l.b16 %v390
  %v463 = vunpack.c.l.b16 %v391
  %v464 = vunpack.c.l.b16 %v392
  %v465 = vunpack.c.l.b16 %v393
  %v466 = vunpack.c.l.b16 %v394
  %v467 = vunpack.c.l.b16 %v395
  %v468 = vunpack.c.l.b16 %v396
  %v469 = vunpack.c.l.b16 %v397
  %v470 = vunpack.c.l.b16 %v398
  %v471 = vunpack.c.l.b16 %v399
  %v472 = vunpack.c.l.b16 %v400
  %v473 = vunpack.c.l.b16 %v401
  %v474 = vunpack.c.l.b16 %v402
  %v475 = vunpack.c.l.b16 %v403
  %v476 = vunpack.c.l.b16 %v404
  %v477 = vunpack.c.l.b16 %v405
  %v478 = vunpack.c.l.b16 %v406
  %v479 = vunpack.c.l.b16 %v407
  %v480 = vunpack.c.l.b16 %v408
  %v481 = vunpack.c.l.b16 %v409
  %v482 = vunpack.c.l.b16 %v410
  %v483 = vunpack.c.l.b16 %v411
  %v484 = vunpack.c.l.b16 %v412
  %v485 = vunpack.c.l.b16 %v413
  %v486 = vunpack.c.l.b16 %v414
  %v487 = vunpack.c.l.b16 %v415
  %v488 = vunpack.c.l.b16 %v416
  %v489 = vpack.c.b16 %v454, %v453
  %v490 = vpack.c.b16 %v456, %v455
  %v491 = vpack.c.b16 %v458, %v457
  %v492 = vpack.c.b16 %v460, %v459
  %v493 = vpack.c.b16 %v462, %v461
  %v494 = vpack.c.b16 %v464, %v463
  %v495 = vpack.c.b16 %v466, %v465
  %v496 = vpack.c.b16 %v468, %v467
  %v497 = vpack.c.b16 %v470, %v469
  %v498 = vpack.c.b16 %v472, %v471
  %v499 = vpack.c.b16 %v474, %v473
  %v500 = vpack.c.b16 %v476, %v475
  %v501 = vpack.c.b16 %v478, %v477
  %v502 = vpack.c.b16 %v480, %v479
  %v503 = vpack.c.b16 %v482, %v481
  %v504 = vpack.c.b16 %v484, %v483
  %v505 = vpack.c.b16 %v486, %v485
  %v506 = vpack.c.b16 %v488, %v487
  %525 = vmatprep.subr.bf16.mxu0 0
  %526 = vmatpush1.bf16.msra.mxu0 %v373
  %527 = vmatprep.subr.bf16.mxu0 0
  %528 = vmatpush1.bf16.msra.mxu0 %v374
  %529 = vmatprep.subr.bf16.mxu0 0
  %530 = vmatpush1.bf16.msra.mxu0 %v375
  %531 = vmatprep.subr.bf16.mxu0 0
  %532 = vmatpush1.bf16.msra.mxu0 %v376
  %533 = vmatprep.subr.bf16.mxu0 0
  %534 = vmatpush1.bf16.msra.mxu0 %v377
  %535 = vmatprep.subr.bf16.mxu0 0
  %536 = vmatpush1.bf16.msra.mxu0 %v378
  %537 = vmatprep.subr.bf16.mxu0 0
  %538 = vmatpush1.bf16.msra.mxu0 %v379
  %539 = vmatprep.subr.bf16.mxu0 0
  %540 = vmatpush1.bf16.msra.mxu0 %v380
  %541 = vmatprep.subr.bf16.mxu0 0
  %542 = vmatpush1.bf16.msra.mxu0 0
  %543 = vmatprep.subr.bf16.mxu0 0
  %544 = vmatpush1.bf16.msra.mxu0 0
  %545 = vmatprep.subr.bf16.mxu0 0
  %546 = vmatpush1.bf16.msra.mxu0 0
  %547 = vmatprep.subr.bf16.mxu0 0
  %548 = vmatpush1.bf16.msra.mxu0 0
  %549 = vmatprep.subr.bf16.mxu0 0
  %550 = vmatpush1.bf16.msra.mxu0 0
  %551 = vmatprep.subr.bf16.mxu0 0
  %552 = vmatpush1.bf16.msra.mxu0 0
  %553 = vmatprep.subr.bf16.mxu0 0
  %554 = vmatpush1.bf16.msra.mxu0 0
  %555 = vmatprep.subr.bf16.mxu0 0
  %556 = vmatpush1.bf16.msra.mxu0 0
  %557 = vmatprep.mubr.bf16.mxu0 0
  %558 = vmatmul.mubr.bf16.gmra.mrb[0].mxu0 %v489
  %v559 = vpop.f32.mrb[0].mxu0
  %v560 = vadd.f32 0.0, %v559
  %v561 = vpop.f32.mrb[0].mxu0
  %v562 = vpop.f32.mrb[0].mxu0
  %v563 = vadd.f32 0.0, %v562
  %v564 = vpop.f32.mrb[0].mxu0
  %565 = vmatprep.mubr.bf16.mxu0 0
  %566 = vmatmul.mubr.bf16.gmra.mrb[0].mxu0 %v490
  %v567 = vpop.f32.mrb[0].mxu0
  %v568 = vadd.f32 0.0, %v567
  %v569 = vpop.f32.mrb[0].mxu0
  %v570 = vpop.f32.mrb[0].mxu0
  %v571 = vadd.f32 0.0, %v570
  %v572 = vpop.f32.mrb[0].mxu0
  %573 = vmatprep.mubr.bf16.mxu0 0
  %574 = vmatmul.mubr.bf16.gmra.mrb[0].mxu0 %v491
  %v575 = vpop.f32.mrb[0].mxu0
  %v576 = vadd.f32 0.0, %v575
  %v577 = vpop.f32.mrb[0].mxu0
  %v578 = vpop.f32.mrb[0].mxu0
  %v579 = vadd.f32 0.0, %v578
  %v580 = vpop.f32.mrb[0].mxu0
  %581 = vmatprep.mubr.bf16.mxu0 0
  %582 = vmatmul.mubr.bf16.gmra.mrb[0].mxu0 %v492
  %v583 = vpop.f32.mrb[0].mxu0
  %v584 = vadd.f32 0.0, %v583
  %v585 = vpop.f32.mrb[0].mxu0
  %v586 = vpop.f32.mrb[0].mxu0
  %v587 = vadd.f32 0.0, %v586
  %v588 = vpop.f32.mrb[0].mxu0
  %589 = vmatprep.mubr.bf16.mxu0 0
  %590 = vmatmul.mubr.bf16.gmra.mrb[0].mxu0 %v493
  %v591 = vpop.f32.mrb[0].mxu0
  %v592 = vadd.f32 0.0, %v591
  %v593 = vpop.f32.mrb[0].mxu0
  %v594 = vpop.f32.mrb[0].mxu0
  %v595 = vadd.f32 0.0, %v594
  %v596 = vpop.f32.mrb[0].mxu0
  %597 = vmatprep.mubr.bf16.mxu0 0
  %598 = vmatmul.mubr.bf16.gmra.mrb[0].mxu0 %v494
  %v599 = vpop.f32.mrb[0].mxu0
  %v600 = vadd.f32 0.0, %v599
  %v601 = vpop.f32.mrb[0].mxu0
  %v602 = vpop.f32.mrb[0].mxu0
  %v603 = vadd.f32 0.0, %v602
  %v604 = vpop.f32.mrb[0].mxu0
  %605 = vmatprep.mubr.bf16.mxu0 0
  %606 = vmatmul.mubr.bf16.gmra.mrb[0].mxu0 %v495
  %v607 = vpop.f32.mrb[0].mxu0
  %v608 = vadd.f32 0.0, %v607
  %v609 = vpop.f32.mrb[0].mxu0
  %v610 = vpop.f32.mrb[0].mxu0
  %v611 = vadd.f32 0.0, %v610
  %v612 = vpop.f32.mrb[0].mxu0
  %613 = vmatprep.mubr.bf16.mxu0 0
  %614 = vmatmul.mubr.bf16.gmra.mrb[0].mxu0 %v496
  %v615 = vpop.f32.mrb[0].mxu0
  %v616 = vadd.f32 0.0, %v615
  %v617 = vpop.f32.mrb[0].mxu0
  %v618 = vpop.f32.mrb[0].mxu0
  %v619 = vadd.f32 0.0, %v618
  %v620 = vpop.f32.mrb[0].mxu0
  %621 = vmatprep.mubr.bf16.mxu0 0
  %622 = vmatmul.mubr.bf16.gmra.mrb[0].mxu0 %v497
  %v623 = vpop.f32.mrb[0].mxu0
  %v624 = vadd.f32 0.0, %v623
  %v625 = vpop.f32.mrb[0].mxu0
  %v626 = vpop.f32.mrb[0].mxu0
  %v627 = vadd.f32 0.0, %v626
  %v628 = vpop.f32.mrb[0].mxu0
  %629 = vmatprep.mubr.bf16.mxu0 0
  %630 = vmatmul.mubr.bf16.gmra.mrb[0].mxu0 %v498
  %v631 = vpop.f32.mrb[0].mxu0
  %v632 = vadd.f32 0.0, %v631
  %v633 = vpop.f32.mrb[0].mxu0
  %v634 = vpop.f32.mrb[0].mxu0
  %v635 = vadd.f32 0.0, %v634
  %v636 = vpop.f32.mrb[0].mxu0
  %637 = vmatprep.mubr.bf16.mxu0 0
  %638 = vmatmul.mubr.bf16.gmra.mrb[0].mxu0 %v499
  %v639 = vpop.f32.mrb[0].mxu0
  %v640 = vadd.f32 0.0, %v639
  %v641 = vpop.f32.mrb[0].mxu0
  %v642 = vpop.f32.mrb[0].mxu0
  %v643 = vadd.f32 0.0, %v642
  %v644 = vpop.f32.mrb[0].mxu0
  %645 = vmatprep.mubr.bf16.mxu0 0
  %646 = vmatmul.mubr.bf16.gmra.mrb[0].mxu0 %v500
  %v647 = vpop.f32.mrb[0].mxu0
  %v648 = vadd.f32 0.0, %v647
  %v649 = vpop.f32.mrb[0].mxu0
  %v650 = vpop.f32.mrb[0].mxu0
  %v651 = vadd.f32 0.0, %v650
  %v652 = vpop.f32.mrb[0].mxu0
  %653 = vmatprep.mubr.bf16.mxu0 0
  %654 = vmatmul.mubr.bf16.gmra.mrb[0].mxu0 %v501
  %v655 = vpop.f32.mrb[0].mxu0
  %v656 = vadd.f32 0.0, %v655
  %v657 = vpop.f32.mrb[0].mxu0
  %v658 = vpop.f32.mrb[0].mxu0
  %v659 = vadd.f32 0.0, %v658
  %v660 = vpop.f32.mrb[0].mxu0
  %661 = vmatprep.mubr.bf16.mxu0 0
  %662 = vmatmul.mubr.bf16.gmra.mrb[0].mxu0 %v502
  %v663 = vpop.f32.mrb[0].mxu0
  %v664 = vadd.f32 0.0, %v663
  %v665 = vpop.f32.mrb[0].mxu0
  %v666 = vpop.f32.mrb[0].mxu0
  %v667 = vadd.f32 0.0, %v666
  %v668 = vpop.f32.mrb[0].mxu0
  %669 = vmatprep.mubr.bf16.mxu0 0
  %670 = vmatmul.mubr.bf16.gmra.mrb[0].mxu0 %v503
  %v671 = vpop.f32.mrb[0].mxu0
  %v672 = vadd.f32 0.0, %v671
  %v673 = vpop.f32.mrb[0].mxu0
  %v674 = vpop.f32.mrb[0].mxu0
  %v675 = vadd.f32 0.0, %v674
  %v676 = vpop.f32.mrb[0].mxu0
  %677 = vmatprep.mubr.bf16.mxu0 0
  %678 = vmatmul.mubr.bf16.gmra.mrb[0].mxu0 %v504
  %v679 = vpop.f32.mrb[0].mxu0
  %v680 = vadd.f32 0.0, %v679
  %v681 = vpop.f32.mrb[0].mxu0
  %v682 = vpop.f32.mrb[0].mxu0
  %v683 = vadd.f32 0.0, %v682
  %v684 = vpop.f32.mrb[0].mxu0
  %685 = vmatprep.mubr.bf16.mxu0 0
  %686 = vmatmul.mubr.bf16.gmra.mrb[0].mxu0 %v505
  %v687 = vpop.f32.mrb[0].mxu0
  %v688 = vadd.f32 0.0, %v687
  %v689 = vpop.f32.mrb[0].mxu0
  %v690 = vpop.f32.mrb[0].mxu0
  %v691 = vadd.f32 0.0, %v690
  %v692 = vpop.f32.mrb[0].mxu0
  %693 = vmatprep.mubr.bf16.mxu0 0
  %694 = vmatmul.mubr.bf16.gmra.mrb[0].mxu0 %v506
  %v695 = vpop.f32.mrb[0].mxu0
  %v696 = vadd.f32 0.0, %v695
  %v697 = vpop.f32.mrb[0].mxu0
  %v698 = vpop.f32.mrb[0].mxu0
  %v699 = vadd.f32 0.0, %v698
  %v700 = vpop.f32.mrb[0].mxu0
  %701 = vdwg.mxu0
  %v702 = vpack.c.bf16 %v563, %v560
  %v703 = vpack.c.bf16 %v571, %v568
  %v704 = vpack.c.bf16 %v579, %v576
  %v705 = vpack.c.bf16 %v587, %v584
  %v706 = vpack.c.bf16 %v595, %v592
  %v707 = vpack.c.bf16 %v603, %v600
  %v708 = vpack.c.bf16 %v611, %v608
  %v709 = vpack.c.bf16 %v619, %v616
  %v710 = vpack.c.bf16 %v627, %v624
  %v711 = vpack.c.bf16 %v635, %v632
  %v712 = vpack.c.bf16 %v643, %v640
  %v713 = vpack.c.bf16 %v651, %v648
  %v714 = vpack.c.bf16 %v659, %v656
  %v715 = vpack.c.bf16 %v667, %v664
  %v716 = vpack.c.bf16 %v675, %v672
  %v717 = vpack.c.bf16 %v683, %v680
  %v718 = vpack.c.bf16 %v691, %v688
  %v719 = vpack.c.bf16 %v699, %v696
  %v720 = vld [vmem:[%s4] sm:$0xf]
  %s721 = scalar_lea.vmem %s4, 4
  %v722 = vld [vmem:[%s721] sm:$0xf]
  %vm723 = vcmask 64512
  %v725 = vsel %vm723, %v704, 0
  %v728 = vsel %vm723, %v705, 0
  %vm730 = vcmask 1043456
  %v732 = vsel %vm730, %v722, 0
  %734 = vmatprep.subr.bf16.mxu0 0
  %735 = vmatpush1.bf16.msra.mxu0 %v732
  %736 = vmatprep.subr.bf16.mxu0 0
  %737 = vmatpush1.bf16.msra.mxu0 0
  %738 = vmatprep.subr.bf16.mxu0 0
  %739 = vmatpush1.bf16.msra.mxu0 0
  %740 = vmatprep.subr.bf16.mxu0 0
  %741 = vmatpush1.bf16.msra.mxu0 0
  %742 = vmatprep.subr.bf16.mxu0 0
  %743 = vmatpush1.bf16.msra.mxu0 0
  %744 = vmatprep.subr.bf16.mxu0 0
  %745 = vmatpush1.bf16.msra.mxu0 0
  %746 = vmatprep.subr.bf16.mxu0 0
  %747 = vmatpush1.bf16.msra.mxu0 0
  %748 = vmatprep.subr.bf16.mxu0 0
  %749 = vmatpush1.bf16.msra.mxu0 0
  %750 = vmatprep.subr.bf16.mxu0 0
  %751 = vmatpush1.bf16.msra.mxu0 0
  %752 = vmatprep.subr.bf16.mxu0 0
  %753 = vmatpush1.bf16.msra.mxu0 0
  %754 = vmatprep.subr.bf16.mxu0 0
  %755 = vmatpush1.bf16.msra.mxu0 0
  %756 = vmatprep.subr.bf16.mxu0 0
  %757 = vmatpush1.bf16.msra.mxu0 0
  %758 = vmatprep.subr.bf16.mxu0 0
  %759 = vmatpush1.bf16.msra.mxu0 0
  %760 = vmatprep.subr.bf16.mxu0 0
  %761 = vmatpush1.bf16.msra.mxu0 0
  %762 = vmatprep.subr.bf16.mxu0 0
  %763 = vmatpush1.bf16.msra.mxu0 0
  %764 = vmatprep.subr.bf16.mxu0 0
  %765 = vmatpush1.bf16.msra.mxu0 0
  %766 = vmatprep.mubr.bf16.mxu0 0
  %767 = vmatmul.mubr.bf16.gmra.mrb[0].mxu0 %v725
  %v768 = vpop.f32.mrb[0].mxu0
  %v769 = vadd.f32 0.0, %v768
  %v770 = vpop.f32.mrb[0].mxu0
  %v771 = vpop.f32.mrb[0].mxu0
  %v772 = vadd.f32 0.0, %v771
  %v773 = vpop.f32.mrb[0].mxu0
  %774 = vmatprep.mubr.bf16.mxu0 0
  %775 = vmatmul.mubr.bf16.gmra.mrb[0].mxu0 %v728
  %v776 = vpop.f32.mrb[0].mxu0
  %v777 = vadd.f32 0.0, %v776
  %v778 = vpop.f32.mrb[0].mxu0
  %v779 = vpop.f32.mrb[0].mxu0
  %v780 = vadd.f32 0.0, %v779
  %v781 = vpop.f32.mrb[0].mxu0
  %782 = vdwg.mxu0
  %v784 = vsel %vm723, %v702, 0
  %v787 = vsel %vm723, %v703, 0
  %v790 = vsel %vm730, %v720, 0
  %792 = vmatprep.subr.bf16.mxu0 0
  %793 = vmatpush1.bf16.msra.mxu0 %v790
  %794 = vmatprep.subr.bf16.mxu0 0
  %795 = vmatpush1.bf16.msra.mxu0 0
  %796 = vmatprep.subr.bf16.mxu0 0
  %797 = vmatpush1.bf16.msra.mxu0 0
  %798 = vmatprep.subr.bf16.mxu0 0
  %799 = vmatpush1.bf16.msra.mxu0 0
  %800 = vmatprep.subr.bf16.mxu0 0
  %801 = vmatpush1.bf16.msra.mxu0 0
  %802 = vmatprep.subr.bf16.mxu0 0
  %803 = vmatpush1.bf16.msra.mxu0 0
  %804 = vmatprep.subr.bf16.mxu0 0
  %805 = vmatpush1.bf16.msra.mxu0 0
  %806 = vmatprep.subr.bf16.mxu0 0
  %807 = vmatpush1.bf16.msra.mxu0 0
  %808 = vmatprep.subr.bf16.mxu0 0
  %809 = vmatpush1.bf16.msra.mxu0 0
  %810 = vmatprep.subr.bf16.mxu0 0
  %811 = vmatpush1.bf16.msra.mxu0 0
  %812 = vmatprep.subr.bf16.mxu0 0
  %813 = vmatpush1.bf16.msra.mxu0 0
  %814 = vmatprep.subr.bf16.mxu0 0
  %815 = vmatpush1.bf16.msra.mxu0 0
  %816 = vmatprep.subr.bf16.mxu0 0
  %817 = vmatpush1.bf16.msra.mxu0 0
  %818 = vmatprep.subr.bf16.mxu0 0
  %819 = vmatpush1.bf16.msra.mxu0 0
  %820 = vmatprep.subr.bf16.mxu0 0
  %821 = vmatpush1.bf16.msra.mxu0 0
  %822 = vmatprep.subr.bf16.mxu0 0
  %823 = vmatpush1.bf16.msra.mxu0 0
  %824 = vmatprep.mubr.bf16.mxu0 0
  %825 = vmatmul.mubr.bf16.gmra.mrb[0].mxu0 %v784
  %v826 = vpop.f32.mrb[0].mxu0
  %v827 = vadd.f32 %v769, %v826
  %v828 = vpop.f32.mrb[0].mxu0
  %v829 = vpop.f32.mrb[0].mxu0
  %v830 = vadd.f32 %v772, %v829
  %v831 = vpop.f32.mrb[0].mxu0
  %832 = vmatprep.mubr.bf16.mxu0 0
  %833 = vmatmul.mubr.bf16.gmra.mrb[0].mxu0 %v787
  %v834 = vpop.f32.mrb[0].mxu0
  %v835 = vadd.f32 %v777, %v834
  %v836 = vpop.f32.mrb[0].mxu0
  %v837 = vpop.f32.mrb[0].mxu0
  %v838 = vadd.f32 %v780, %v837
  %v839 = vpop.f32.mrb[0].mxu0
  %840 = vdwg.mxu0
  %s841 = scalar_lea.vmem %s4, 8
  %v842 = vld [vmem:[%s841] sm:$0xf]
  %v844 = vsel %vm723, %v706, 0
  %v847 = vsel %vm723, %v707, 0
  %v850 = vsel %vm730, %v842, 0
  %852 = vmatprep.subr.bf16.mxu0 0
  %853 = vmatpush1.bf16.msra.mxu0 %v850
  %854 = vmatprep.subr.bf16.mxu0 0
  %855 = vmatpush1.bf16.msra.mxu0 0
  %856 = vmatprep.subr.bf16.mxu0 0
  %857 = vmatpush1.bf16.msra.mxu0 0
  %858 = vmatprep.subr.bf16.mxu0 0
  %859 = vmatpush1.bf16.msra.mxu0 0
  %860 = vmatprep.subr.bf16.mxu0 0
  %861 = vmatpush1.bf16.msra.mxu0 0
  %862 = vmatprep.subr.bf16.mxu0 0
  %863 = vmatpush1.bf16.msra.mxu0 0
  %864 = vmatprep.subr.bf16.mxu0 0
  %865 = vmatpush1.bf16.msra.mxu0 0
  %866 = vmatprep.subr.bf16.mxu0 0
  %867 = vmatpush1.bf16.msra.mxu0 0
  %868 = vmatprep.subr.bf16.mxu0 0
  %869 = vmatpush1.bf16.msra.mxu0 0
  %870 = vmatprep.subr.bf16.mxu0 0
  %871 = vmatpush1.bf16.msra.mxu0 0
  %872 = vmatprep.subr.bf16.mxu0 0
  %873 = vmatpush1.bf16.msra.mxu0 0
  %874 = vmatprep.subr.bf16.mxu0 0
  %875 = vmatpush1.bf16.msra.mxu0 0
  %876 = vmatprep.subr.bf16.mxu0 0
  %877 = vmatpush1.bf16.msra.mxu0 0
  %878 = vmatprep.subr.bf16.mxu0 0
  %879 = vmatpush1.bf16.msra.mxu0 0
  %880 = vmatprep.subr.bf16.mxu0 0
  %881 = vmatpush1.bf16.msra.mxu0 0
  %882 = vmatprep.subr.bf16.mxu0 0
  %883 = vmatpush1.bf16.msra.mxu0 0
  %884 = vmatprep.mubr.bf16.mxu0 0
  %885 = vmatmul.mubr.bf16.gmra.mrb[0].mxu0 %v844
  %v886 = vpop.f32.mrb[0].mxu0
  %v887 = vadd.f32 0.0, %v886
  %v888 = vpop.f32.mrb[0].mxu0
  %v889 = vpop.f32.mrb[0].mxu0
  %v890 = vadd.f32 0.0, %v889
  %v891 = vpop.f32.mrb[0].mxu0
  %892 = vmatprep.mubr.bf16.mxu0 0
  %893 = vmatmul.mubr.bf16.gmra.mrb[0].mxu0 %v847
  %v894 = vpop.f32.mrb[0].mxu0
  %v895 = vadd.f32 0.0, %v894
  %v896 = vpop.f32.mrb[0].mxu0
  %v897 = vpop.f32.mrb[0].mxu0
  %v898 = vadd.f32 0.0, %v897
  %v899 = vpop.f32.mrb[0].mxu0
  %900 = vdwg.mxu0
  %v901 = vadd.f32 %v827, %v887
  %v902 = vadd.f32 %v830, %v890
  %v903 = vadd.f32 %v835, %v895
  %v904 = vadd.f32 %v838, %v898
  %s905 = scalar_lea.vmem %s4, 12
  %v906 = vld [vmem:[%s905] sm:$0xf]
  %v908 = vsel %vm723, %v708, 0
  %v911 = vsel %vm723, %v709, 0
  %v914 = vsel %vm730, %v906, 0
  %916 = vmatprep.subr.bf16.mxu0 0
  %917 = vmatpush1.bf16.msra.mxu0 %v914
  %918 = vmatprep.subr.bf16.mxu0 0
  %919 = vmatpush1.bf16.msra.mxu0 0
  %920 = vmatprep.subr.bf16.mxu0 0
  %921 = vmatpush1.bf16.msra.mxu0 0
  %922 = vmatprep.subr.bf16.mxu0 0
  %923 = vmatpush1.bf16.msra.mxu0 0
  %924 = vmatprep.subr.bf16.mxu0 0
  %925 = vmatpush1.bf16.msra.mxu0 0
  %926 = vmatprep.subr.bf16.mxu0 0
  %927 = vmatpush1.bf16.msra.mxu0 0
  %928 = vmatprep.subr.bf16.mxu0 0
  %929 = vmatpush1.bf16.msra.mxu0 0
  %930 = vmatprep.subr.bf16.mxu0 0
  %931 = vmatpush1.bf16.msra.mxu0 0
  %932 = vmatprep.subr.bf16.mxu0 0
  %933 = vmatpush1.bf16.msra.mxu0 0
  %934 = vmatprep.subr.bf16.mxu0 0
  %935 = vmatpush1.bf16.msra.mxu0 0
  %936 = vmatprep.subr.bf16.mxu0 0
  %937 = vmatpush1.bf16.msra.mxu0 0
  %938 = vmatprep.subr.bf16.mxu0 0
  %939 = vmatpush1.bf16.msra.mxu0 0
  %940 = vmatprep.subr.bf16.mxu0 0
  %941 = vmatpush1.bf16.msra.mxu0 0
  %942 = vmatprep.subr.bf16.mxu0 0
  %943 = vmatpush1.bf16.msra.mxu0 0
  %944 = vmatprep.subr.bf16.mxu0 0
  %945 = vmatpush1.bf16.msra.mxu0 0
  %946 = vmatprep.subr.bf16.mxu0 0
  %947 = vmatpush1.bf16.msra.mxu0 0
  %948 = vmatprep.mubr.bf16.mxu0 0
  %949 = vmatmul.mubr.bf16.gmra.mrb[0].mxu0 %v908
  %v950 = vpop.f32.mrb[0].mxu0
  %v951 = vadd.f32 0.0, %v950
  %v952 = vpop.f32.mrb[0].mxu0
  %v953 = vpop.f32.mrb[0].mxu0
  %v954 = vadd.f32 0.0, %v953
  %v955 = vpop.f32.mrb[0].mxu0
  %956 = vmatprep.mubr.bf16.mxu0 0
  %957 = vmatmul.mubr.bf16.gmra.mrb[0].mxu0 %v911
  %v958 = vpop.f32.mrb[0].mxu0
  %v959 = vadd.f32 0.0, %v958
  %v960 = vpop.f32.mrb[0].mxu0
  %v961 = vpop.f32.mrb[0].mxu0
  %v962 = vadd.f32 0.0, %v961
  %v963 = vpop.f32.mrb[0].mxu0
  %964 = vdwg.mxu0
  %v965 = vadd.f32 %v901, %v951
  %v966 = vadd.f32 %v902, %v954
  %v967 = vadd.f32 %v903, %v959
  %v968 = vadd.f32 %v904, %v962
  %s969 = scalar_lea.vmem %s4, 16
  %v970 = vld [vmem:[%s969] sm:$0xf]
  %v972 = vsel %vm723, %v710, 0
  %v975 = vsel %vm723, %v711, 0
  %v978 = vsel %vm730, %v970, 0
  %980 = vmatprep.subr.bf16.mxu0 0
  %981 = vmatpush1.bf16.msra.mxu0 %v978
  %982 = vmatprep.subr.bf16.mxu0 0
  %983 = vmatpush1.bf16.msra.mxu0 0
  %984 = vmatprep.subr.bf16.mxu0 0
  %985 = vmatpush1.bf16.msra.mxu0 0
  %986 = vmatprep.subr.bf16.mxu0 0
  %987 = vmatpush1.bf16.msra.mxu0 0
  %988 = vmatprep.subr.bf16.mxu0 0
  %989 = vmatpush1.bf16.msra.mxu0 0
  %990 = vmatprep.subr.bf16.mxu0 0
  %991 = vmatpush1.bf16.msra.mxu0 0
  %992 = vmatprep.subr.bf16.mxu0 0
  %993 = vmatpush1.bf16.msra.mxu0 0
  %994 = vmatprep.subr.bf16.mxu0 0
  %995 = vmatpush1.bf16.msra.mxu0 0
  %996 = vmatprep.subr.bf16.mxu0 0
  %997 = vmatpush1.bf16.msra.mxu0 0
  %998 = vmatprep.subr.bf16.mxu0 0
  %999 = vmatpush1.bf16.msra.mxu0 0
  %1000 = vmatprep.subr.bf16.mxu0 0
  %1001 = vmatpush1.bf16.msra.mxu0 0
  %1002 = vmatprep.subr.bf16.mxu0 0
  %1003 = vmatpush1.bf16.msra.mxu0 0
  %1004 = vmatprep.subr.bf16.mxu0 0
  %1005 = vmatpush1.bf16.msra.mxu0 0
  %1006 = vmatprep.subr.bf16.mxu0 0
  %1007 = vmatpush1.bf16.msra.mxu0 0
  %1008 = vmatprep.subr.bf16.mxu0 0
  %1009 = vmatpush1.bf16.msra.mxu0 0
  %1010 = vmatprep.subr.bf16.mxu0 0
  %1011 = vmatpush1.bf16.msra.mxu0 0
  %1012 = vmatprep.mubr.bf16.mxu0 0
  %1013 = vmatmul.mubr.bf16.gmra.mrb[0].mxu0 %v972
  %v1014 = vpop.f32.mrb[0].mxu0
  %v1015 = vadd.f32 0.0, %v1014
  %v1016 = vpop.f32.mrb[0].mxu0
  %v1017 = vpop.f32.mrb[0].mxu0
  %v1018 = vadd.f32 0.0, %v1017
  %v1019 = vpop.f32.mrb[0].mxu0
  %1020 = vmatprep.mubr.bf16.mxu0 0
  %1021 = vmatmul.mubr.bf16.gmra.mrb[0].mxu0 %v975
  %v1022 = vpop.f32.mrb[0].mxu0
  %v1023 = vadd.f32 0.0, %v1022
  %v1024 = vpop.f32.mrb[0].mxu0
  %v1025 = vpop.f32.mrb[0].mxu0
  %v1026 = vadd.f32 0.0, %v1025
  %v1027 = vpop.f32.mrb[0].mxu0
  %1028 = vdwg.mxu0
  %v1029 = vadd.f32 %v965, %v1015
  %v1030 = vadd.f32 %v966, %v1018
  %v1031 = vadd.f32 %v967, %v1023
  %v1032 = vadd.f32 %v968, %v1026
  %s1033 = scalar_lea.vmem %s4, 20
  %v1034 = vld [vmem:[%s1033] sm:$0xf]
  %v1036 = vsel %vm723, %v712, 0
  %v1039 = vsel %vm723, %v713, 0
  %v1042 = vsel %vm730, %v1034, 0
  %1044 = vmatprep.subr.bf16.mxu0 0
  %1045 = vmatpush1.bf16.msra.mxu0 %v1042
  %1046 = vmatprep.subr.bf16.mxu0 0
  %1047 = vmatpush1.bf16.msra.mxu0 0
  %1048 = vmatprep.subr.bf16.mxu0 0
  %1049 = vmatpush1.bf16.msra.mxu0 0
  %1050 = vmatprep.subr.bf16.mxu0 0
  %1051 = vmatpush1.bf16.msra.mxu0 0
  %1052 = vmatprep.subr.bf16.mxu0 0
  %1053 = vmatpush1.bf16.msra.mxu0 0
  %1054 = vmatprep.subr.bf16.mxu0 0
  %1055 = vmatpush1.bf16.msra.mxu0 0
  %1056 = vmatprep.subr.bf16.mxu0 0
  %1057 = vmatpush1.bf16.msra.mxu0 0
  %1058 = vmatprep.subr.bf16.mxu0 0
  %1059 = vmatpush1.bf16.msra.mxu0 0
  %1060 = vmatprep.subr.bf16.mxu0 0
  %1061 = vmatpush1.bf16.msra.mxu0 0
  %1062 = vmatprep.subr.bf16.mxu0 0
  %1063 = vmatpush1.bf16.msra.mxu0 0
  %1064 = vmatprep.subr.bf16.mxu0 0
  %1065 = vmatpush1.bf16.msra.mxu0 0
  %1066 = vmatprep.subr.bf16.mxu0 0
  %1067 = vmatpush1.bf16.msra.mxu0 0
  %1068 = vmatprep.subr.bf16.mxu0 0
  %1069 = vmatpush1.bf16.msra.mxu0 0
  %1070 = vmatprep.subr.bf16.mxu0 0
  %1071 = vmatpush1.bf16.msra.mxu0 0
  %1072 = vmatprep.subr.bf16.mxu0 0
  %1073 = vmatpush1.bf16.msra.mxu0 0
  %1074 = vmatprep.subr.bf16.mxu0 0
  %1075 = vmatpush1.bf16.msra.mxu0 0
  %1076 = vmatprep.mubr.bf16.mxu0 0
  %1077 = vmatmul.mubr.bf16.gmra.mrb[0].mxu0 %v1036
  %v1078 = vpop.f32.mrb[0].mxu0
  %v1079 = vadd.f32 0.0, %v1078
  %v1080 = vpop.f32.mrb[0].mxu0
  %v1081 = vpop.f32.mrb[0].mxu0
  %v1082 = vadd.f32 0.0, %v1081
  %v1083 = vpop.f32.mrb[0].mxu0
  %1084 = vmatprep.mubr.bf16.mxu0 0
  %1085 = vmatmul.mubr.bf16.gmra.mrb[0].mxu0 %v1039
  %v1086 = vpop.f32.mrb[0].mxu0
  %v1087 = vadd.f32 0.0, %v1086
  %v1088 = vpop.f32.mrb[0].mxu0
  %v1089 = vpop.f32.mrb[0].mxu0
  %v1090 = vadd.f32 0.0, %v1089
  %v1091 = vpop.f32.mrb[0].mxu0
  %1092 = vdwg.mxu0
  %v1093 = vadd.f32 %v1029, %v1079
  %v1094 = vadd.f32 %v1030, %v1082
  %v1095 = vadd.f32 %v1031, %v1087
  %v1096 = vadd.f32 %v1032, %v1090
  %s1097 = scalar_lea.vmem %s4, 24
  %v1098 = vld [vmem:[%s1097] sm:$0xf]
  %v1100 = vsel %vm723, %v714, 0
  %v1103 = vsel %vm723, %v715, 0
  %v1106 = vsel %vm730, %v1098, 0
  %1108 = vmatprep.subr.bf16.mxu0 0
  %1109 = vmatpush1.bf16.msra.mxu0 %v1106
  %1110 = vmatprep.subr.bf16.mxu0 0
  %1111 = vmatpush1.bf16.msra.mxu0 0
  %1112 = vmatprep.subr.bf16.mxu0 0
  %1113 = vmatpush1.bf16.msra.mxu0 0
  %1114 = vmatprep.subr.bf16.mxu0 0
  %1115 = vmatpush1.bf16.msra.mxu0 0
  %1116 = vmatprep.subr.bf16.mxu0 0
  %1117 = vmatpush1.bf16.msra.mxu0 0
  %1118 = vmatprep.subr.bf16.mxu0 0
  %1119 = vmatpush1.bf16.msra.mxu0 0
  %1120 = vmatprep.subr.bf16.mxu0 0
  %1121 = vmatpush1.bf16.msra.mxu0 0
  %1122 = vmatprep.subr.bf16.mxu0 0
  %1123 = vmatpush1.bf16.msra.mxu0 0
  %1124 = vmatprep.subr.bf16.mxu0 0
  %1125 = vmatpush1.bf16.msra.mxu0 0
  %1126 = vmatprep.subr.bf16.mxu0 0
  %1127 = vmatpush1.bf16.msra.mxu0 0
  %1128 = vmatprep.subr.bf16.mxu0 0
  %1129 = vmatpush1.bf16.msra.mxu0 0
  %1130 = vmatprep.subr.bf16.mxu0 0
  %1131 = vmatpush1.bf16.msra.mxu0 0
  %1132 = vmatprep.subr.bf16.mxu0 0
  %1133 = vmatpush1.bf16.msra.mxu0 0
  %1134 = vmatprep.subr.bf16.mxu0 0
  %1135 = vmatpush1.bf16.msra.mxu0 0
  %1136 = vmatprep.subr.bf16.mxu0 0
  %1137 = vmatpush1.bf16.msra.mxu0 0
  %1138 = vmatprep.subr.bf16.mxu0 0
  %1139 = vmatpush1.bf16.msra.mxu0 0
  %1140 = vmatprep.mubr.bf16.mxu0 0
  %1141 = vmatmul.mubr.bf16.gmra.mrb[0].mxu0 %v1100
  %v1142 = vpop.f32.mrb[0].mxu0
  %v1143 = vadd.f32 0.0, %v1142
  %v1144 = vpop.f32.mrb[0].mxu0
  %v1145 = vpop.f32.mrb[0].mxu0
  %v1146 = vadd.f32 0.0, %v1145
  %v1147 = vpop.f32.mrb[0].mxu0
  %1148 = vmatprep.mubr.bf16.mxu0 0
  %1149 = vmatmul.mubr.bf16.gmra.mrb[0].mxu0 %v1103
  %v1150 = vpop.f32.mrb[0].mxu0
  %v1151 = vadd.f32 0.0, %v1150
  %v1152 = vpop.f32.mrb[0].mxu0
  %v1153 = vpop.f32.mrb[0].mxu0
  %v1154 = vadd.f32 0.0, %v1153
  %v1155 = vpop.f32.mrb[0].mxu0
  %1156 = vdwg.mxu0
  %v1157 = vadd.f32 %v1093, %v1143
  %v1158 = vadd.f32 %v1094, %v1146
  %v1159 = vadd.f32 %v1095, %v1151
  %v1160 = vadd.f32 %v1096, %v1154
  %s1161 = scalar_lea.vmem %s4, 28
  %v1162 = vld [vmem:[%s1161] sm:$0xf]
  %v1164 = vsel %vm723, %v716, 0
  %v1167 = vsel %vm723, %v717, 0
  %v1170 = vsel %vm730, %v1162, 0
  %1172 = vmatprep.subr.bf16.mxu0 0
  %1173 = vmatpush1.bf16.msra.mxu0 %v1170
  %1174 = vmatprep.subr.bf16.mxu0 0
  %1175 = vmatpush1.bf16.msra.mxu0 0
  %1176 = vmatprep.subr.bf16.mxu0 0
  %1177 = vmatpush1.bf16.msra.mxu0 0
  %1178 = vmatprep.subr.bf16.mxu0 0
  %1179 = vmatpush1.bf16.msra.mxu0 0
  %1180 = vmatprep.subr.bf16.mxu0 0
  %1181 = vmatpush1.bf16.msra.mxu0 0
  %1182 = vmatprep.subr.bf16.mxu0 0
  %1183 = vmatpush1.bf16.msra.mxu0 0
  %1184 = vmatprep.subr.bf16.mxu0 0
  %1185 = vmatpush1.bf16.msra.mxu0 0
  %1186 = vmatprep.subr.bf16.mxu0 0
  %1187 = vmatpush1.bf16.msra.mxu0 0
  %1188 = vmatprep.subr.bf16.mxu0 0
  %1189 = vmatpush1.bf16.msra.mxu0 0
  %1190 = vmatprep.subr.bf16.mxu0 0
  %1191 = vmatpush1.bf16.msra.mxu0 0
  %1192 = vmatprep.subr.bf16.mxu0 0
  %1193 = vmatpush1.bf16.msra.mxu0 0
  %1194 = vmatprep.subr.bf16.mxu0 0
  %1195 = vmatpush1.bf16.msra.mxu0 0
  %1196 = vmatprep.subr.bf16.mxu0 0
  %1197 = vmatpush1.bf16.msra.mxu0 0
  %1198 = vmatprep.subr.bf16.mxu0 0
  %1199 = vmatpush1.bf16.msra.mxu0 0
  %1200 = vmatprep.subr.bf16.mxu0 0
  %1201 = vmatpush1.bf16.msra.mxu0 0
  %1202 = vmatprep.subr.bf16.mxu0 0
  %1203 = vmatpush1.bf16.msra.mxu0 0
  %1204 = vmatprep.mubr.bf16.mxu0 0
  %1205 = vmatmul.mubr.bf16.gmra.mrb[0].mxu0 %v1164
  %v1206 = vpop.f32.mrb[0].mxu0
  %v1207 = vadd.f32 0.0, %v1206
  %v1208 = vpop.f32.mrb[0].mxu0
  %v1209 = vpop.f32.mrb[0].mxu0
  %v1210 = vadd.f32 0.0, %v1209
  %v1211 = vpop.f32.mrb[0].mxu0
  %1212 = vmatprep.mubr.bf16.mxu0 0
  %1213 = vmatmul.mubr.bf16.gmra.mrb[0].mxu0 %v1167
  %v1214 = vpop.f32.mrb[0].mxu0
  %v1215 = vadd.f32 0.0, %v1214
  %v1216 = vpop.f32.mrb[0].mxu0
  %v1217 = vpop.f32.mrb[0].mxu0
  %v1218 = vadd.f32 0.0, %v1217
  %v1219 = vpop.f32.mrb[0].mxu0
  %1220 = vdwg.mxu0
  %v1221 = vadd.f32 %v1157, %v1207
  %v1222 = vadd.f32 %v1158, %v1210
  %v1223 = vadd.f32 %v1159, %v1215
  %v1224 = vadd.f32 %v1160, %v1218
  %s1225 = scalar_lea.vmem %s4, 32
  %v1226 = vld [vmem:[%s1225] sm:$0xf]
  %v1228 = vsel %vm723, %v718, 0
  %v1231 = vsel %vm723, %v719, 0
  %v1234 = vsel %vm730, %v1226, 0
  %1236 = vmatprep.subr.bf16.mxu0 0
  %1237 = vmatpush1.bf16.msra.mxu0 %v1234
  %1238 = vmatprep.subr.bf16.mxu0 0
  %1239 = vmatpush1.bf16.msra.mxu0 0
  %1240 = vmatprep.subr.bf16.mxu0 0
  %1241 = vmatpush1.bf16.msra.mxu0 0
  %1242 = vmatprep.subr.bf16.mxu0 0
  %1243 = vmatpush1.bf16.msra.mxu0 0
  %1244 = vmatprep.subr.bf16.mxu0 0
  %1245 = vmatpush1.bf16.msra.mxu0 0
  %1246 = vmatprep.subr.bf16.mxu0 0
  %1247 = vmatpush1.bf16.msra.mxu0 0
  %1248 = vmatprep.subr.bf16.mxu0 0
  %1249 = vmatpush1.bf16.msra.mxu0 0
  %1250 = vmatprep.subr.bf16.mxu0 0
  %1251 = vmatpush1.bf16.msra.mxu0 0
  %1252 = vmatprep.subr.bf16.mxu0 0
  %1253 = vmatpush1.bf16.msra.mxu0 0
  %1254 = vmatprep.subr.bf16.mxu0 0
  %1255 = vmatpush1.bf16.msra.mxu0 0
  %1256 = vmatprep.subr.bf16.mxu0 0
  %1257 = vmatpush1.bf16.msra.mxu0 0
  %1258 = vmatprep.subr.bf16.mxu0 0
  %1259 = vmatpush1.bf16.msra.mxu0 0
  %1260 = vmatprep.subr.bf16.mxu0 0
  %1261 = vmatpush1.bf16.msra.mxu0 0
  %1262 = vmatprep.subr.bf16.mxu0 0
  %1263 = vmatpush1.bf16.msra.mxu0 0
  %1264 = vmatprep.subr.bf16.mxu0 0
  %1265 = vmatpush1.bf16.msra.mxu0 0
  %1266 = vmatprep.subr.bf16.mxu0 0
  %1267 = vmatpush1.bf16.msra.mxu0 0
  %1268 = vmatprep.mubr.bf16.mxu0 0
  %1269 = vmatmul.mubr.bf16.gmra.mrb[0].mxu0 %v1228
  %v1270 = vpop.f32.mrb[0].mxu0
  %v1271 = vadd.f32 0.0, %v1270
  %v1272 = vpop.f32.mrb[0].mxu0
  %v1273 = vpop.f32.mrb[0].mxu0
  %v1274 = vadd.f32 0.0, %v1273
  %v1275 = vpop.f32.mrb[0].mxu0
  %1276 = vmatprep.mubr.bf16.mxu0 0
  %1277 = vmatmul.mubr.bf16.gmra.mrb[0].mxu0 %v1231
  %v1278 = vpop.f32.mrb[0].mxu0
  %v1279 = vadd.f32 0.0, %v1278
  %v1280 = vpop.f32.mrb[0].mxu0
  %v1281 = vpop.f32.mrb[0].mxu0
  %v1282 = vadd.f32 0.0, %v1281
  %v1283 = vpop.f32.mrb[0].mxu0
  %1284 = vdwg.mxu0
  %v1285 = vadd.f32 %v1221, %v1271
  %v1286 = vadd.f32 %v1222, %v1274
  %v1287 = vadd.f32 %v1223, %v1279
  %v1288 = vadd.f32 %v1224, %v1282
  %v1289 = vld [vmem:[%s5] sm:$0x1]
  %v1291 = vlaneseq
  %v1292 = vshrl.u32 %v1291, 7
  %v1293 = vsub.s32 0, %v1292
  %v1294 = vrot.slane %v1289, %v1293
  %v1296 = vadd.f32 %v1285, %v1294
  %v1297 = vadd.f32 %v1286, %v1294
  %v1298 = vadd.f32 %v1287, %v1294
  %v1299 = vadd.f32 %v1288, %v1294
  %v1300 = vsub.f32 0.0, %v1296
  %v1301 = vsub.f32 0.0, %v1297
  %v1302 = vsub.f32 0.0, %v1298
  %v1303 = vsub.f32 0.0, %v1299
  %v1304 = vmul.f32 %v1300, 1.442695
  %v1305 = vpow.pop %v1304
  %v1306 = vmul.f32 %v1301, 1.442695
  %v1307 = vpow.pop %v1306
  %v1308 = vmul.f32 %v1302, 1.442695
  %v1309 = vpow.pop %v1308
  %v1310 = vmul.f32 %v1303, 1.442695
  %v1311 = vpow.pop %v1310
  %v1312 = vadd.f32 %v1305, 1.0
  %v1313 = vadd.f32 %v1307, 1.0
  %v1314 = vadd.f32 %v1309, 1.0
  %v1315 = vadd.f32 %v1311, 1.0
  %v1316 = vrcp.pop %v1312
  %v1317 = vrcp.pop %v1313
  %v1318 = vrcp.pop %v1314
  %v1319 = vrcp.pop %v1315
  %v1320 = vmul.f32 %v1296, %v1316
  %v1321 = vmul.f32 %v1297, %v1317
  %v1322 = vmul.f32 %v1298, %v1318
  %v1323 = vmul.f32 %v1299, %v1319
  %v1324 = vpack.c.bf16 %v1321, %v1320
  %v1325 = vpack.c.bf16 %v1323, %v1322
  %v1326 = vld [vmem:[%s6] sm:$0xf]
  %v1327 = vld [vmem:[%s6 + $0x4] sm:$0xf]
  %v1328 = vld [vmem:[%s7] sm:$0x1]
  %v1330 = vlaneseq
  %v1331 = vshrl.u32 %v1330, 7
  %v1332 = vsub.s32 0, %v1331
  %v1333 = vrot.slane %v1328, %v1332
  %v1337 = vunpack.c.l.b16 %v1326
  %v1338 = vunpack.c.l.b16 %v1327
  %v1339 = vpack.c.b16 %v1338, %v1337
  %vm1341 = vcmask 130048
  %v1343 = vsel %vm1341, %v1324, 0
  %v1346 = vsel %vm1341, %v1325, 0
  %1348 = vmatprep.subr.bf16.mxu0 0
  %1349 = vmatpush1.bf16.msra.mxu0 %v1339
  %1350 = vmatprep.subr.bf16.mxu0 0
  %1351 = vmatpush1.bf16.msra.mxu0 0
  %1352 = vmatprep.subr.bf16.mxu0 0
  %1353 = vmatpush1.bf16.msra.mxu0 0
  %1354 = vmatprep.subr.bf16.mxu0 0
  %1355 = vmatpush1.bf16.msra.mxu0 0
  %1356 = vmatprep.subr.bf16.mxu0 0
  %1357 = vmatpush1.bf16.msra.mxu0 0
  %1358 = vmatprep.subr.bf16.mxu0 0
  %1359 = vmatpush1.bf16.msra.mxu0 0
  %1360 = vmatprep.subr.bf16.mxu0 0
  %1361 = vmatpush1.bf16.msra.mxu0 0
  %1362 = vmatprep.subr.bf16.mxu0 0
  %1363 = vmatpush1.bf16.msra.mxu0 0
  %1364 = vmatprep.subr.bf16.mxu0 0
  %1365 = vmatpush1.bf16.msra.mxu0 0
  %1366 = vmatprep.subr.bf16.mxu0 0
  %1367 = vmatpush1.bf16.msra.mxu0 0
  %1368 = vmatprep.subr.bf16.mxu0 0
  %1369 = vmatpush1.bf16.msra.mxu0 0
  %1370 = vmatprep.subr.bf16.mxu0 0
  %1371 = vmatpush1.bf16.msra.mxu0 0
  %1372 = vmatprep.subr.bf16.mxu0 0
  %1373 = vmatpush1.bf16.msra.mxu0 0
  %1374 = vmatprep.subr.bf16.mxu0 0
  %1375 = vmatpush1.bf16.msra.mxu0 0
  %1376 = vmatprep.subr.bf16.mxu0 0
  %1377 = vmatpush1.bf16.msra.mxu0 0
  %1378 = vmatprep.subr.bf16.mxu0 0
  %1379 = vmatpush1.bf16.msra.mxu0 0
  %1380 = vmatprep.mubr.bf16.mxu0 0
  %1381 = vmatmul.mubr.bf16.gmra.mrb[0].mxu0 %v1343
  %v1382 = vpop.f32.mrb[0].mxu0
  %v1383 = vadd.f32 %v1333, %v1382
  %v1384 = vpop.f32.mrb[0].mxu0
  %v1385 = vpop.f32.mrb[0].mxu0
  %v1386 = vadd.f32 %v1333, %v1385
  %v1387 = vpop.f32.mrb[0].mxu0
  %1388 = vmatprep.mubr.bf16.mxu0 0
  %1389 = vmatmul.mubr.bf16.gmra.mrb[0].mxu0 %v1346
  %v1390 = vpop.f32.mrb[0].mxu0
  %v1391 = vadd.f32 %v1333, %v1390
  %v1392 = vpop.f32.mrb[0].mxu0
  %v1393 = vpop.f32.mrb[0].mxu0
  %v1394 = vadd.f32 %v1333, %v1393
  %v1395 = vpop.f32.mrb[0].mxu0
  %1396 = vdwg.mxu0
  %v1397 = vsub.f32 0.0, %v1383
  %v1398 = vsub.f32 0.0, %v1386
  %v1399 = vsub.f32 0.0, %v1391
  %v1400 = vsub.f32 0.0, %v1394
  %v1401 = vmul.f32 %v1397, 1.442695
  %v1402 = vpow.pop %v1401
  %v1403 = vmul.f32 %v1398, 1.442695
  %v1404 = vpow.pop %v1403
  %v1405 = vmul.f32 %v1399, 1.442695
  %v1406 = vpow.pop %v1405
  %v1407 = vmul.f32 %v1400, 1.442695
  %v1408 = vpow.pop %v1407
  %v1409 = vadd.f32 %v1402, 1.0
  %v1410 = vadd.f32 %v1404, 1.0
  %v1411 = vadd.f32 %v1406, 1.0
  %v1412 = vadd.f32 %v1408, 1.0
  %v1413 = vrcp.pop %v1409
  %v1414 = vrcp.pop %v1410
  %v1415 = vrcp.pop %v1411
  %v1416 = vrcp.pop %v1412
  %v1417 = vmul.f32 %v1383, %v1413
  %v1418 = vmul.f32 %v1386, %v1414
  %v1419 = vmul.f32 %v1391, %v1415
  %v1420 = vmul.f32 %v1394, %v1416
  %v1421 = vpack.c.bf16 %v1418, %v1417
  %v1422 = vpack.c.bf16 %v1420, %v1419
  %v1423 = vld [vmem:[%s8] sm:$0xf]
  %v1424 = vld [vmem:[%s8 + $0x4] sm:$0xf]
  %v1425 = vld [vmem:[%s8 + $0x8] sm:$0xf]
  %v1426 = vld [vmem:[%s8 + $0xc] sm:$0xf]
  %v1427 = vld [vmem:[%s8 + $0x10] sm:$0xf]
  %v1428 = vld [vmem:[%s8 + $0x14] sm:$0xf]
  %v1429 = vld [vmem:[%s8 + $0x18] sm:$0xf]
  %v1430 = vld [vmem:[%s8 + $0x1c] sm:$0xf]
  %v1431 = vld [vmem:[%s8 + $0x20] sm:$0xf]
  %v1432 = vld [vmem:[%s8 + $0x24] sm:$0xf]
  %v1433 = vld [vmem:[%s8 + $0x28] sm:$0xf]
  %v1434 = vld [vmem:[%s8 + $0x2c] sm:$0xf]
  %v1435 = vld [vmem:[%s8 + $0x30] sm:$0xf]
  %v1436 = vld [vmem:[%s8 + $0x34] sm:$0xf]
  %v1437 = vld [vmem:[%s8 + $0x38] sm:$0xf]
  %v1438 = vld [vmem:[%s8 + $0x3c] sm:$0xf]
  %v1439 = vld [vmem:[%s8 + $0x40] sm:$0xf]
  %v1440 = vld [vmem:[%s8 + $0x44] sm:$0xf]
  %v1441 = vld [vmem:[%s8 + $0x48] sm:$0xf]
  %v1442 = vld [vmem:[%s8 + $0x4c] sm:$0xf]
  %v1443 = vld [vmem:[%s8 + $0x50] sm:$0xf]
  %v1444 = vld [vmem:[%s8 + $0x54] sm:$0xf]
  %v1445 = vld [vmem:[%s8 + $0x58] sm:$0xf]
  %v1446 = vld [vmem:[%s8 + $0x5c] sm:$0xf]
  %v1447 = vld [vmem:[%s8 + $0x60] sm:$0xf]
  %v1448 = vld [vmem:[%s8 + $0x64] sm:$0xf]
  %v1449 = vld [vmem:[%s8 + $0x68] sm:$0xf]
  %v1450 = vld [vmem:[%s8 + $0x6c] sm:$0xf]
  %v1451 = vld [vmem:[%s8 + $0x70] sm:$0xf]
  %v1452 = vld [vmem:[%s8 + $0x74] sm:$0xf]
  %v1453 = vld [vmem:[%s8 + $0x78] sm:$0xf]
  %v1454 = vld [vmem:[%s8 + $0x7c] sm:$0xf]
  %v1455 = vld [vmem:[%s8 + $0x80] sm:$0xf]
  %v1456 = vld [vmem:[%s8 + $0x84] sm:$0xf]
  %v1457 = vld [vmem:[%s8 + $0x88] sm:$0xf]
  %v1458 = vld [vmem:[%s8 + $0x8c] sm:$0xf]
  %v1495 = vunpack.c.l.b16 %v1423
  %v1496 = vunpack.c.l.b16 %v1424
  %v1497 = vunpack.c.l.b16 %v1425
  %v1498 = vunpack.c.l.b16 %v1426
  %v1499 = vunpack.c.l.b16 %v1427
  %v1500 = vunpack.c.l.b16 %v1428
  %v1501 = vunpack.c.l.b16 %v1429
  %v1502 = vunpack.c.l.b16 %v1430
  %v1503 = vunpack.c.l.b16 %v1431
  %v1504 = vunpack.c.l.b16 %v1432
  %v1505 = vunpack.c.l.b16 %v1433
  %v1506 = vunpack.c.l.b16 %v1434
  %v1507 = vunpack.c.l.b16 %v1435
  %v1508 = vunpack.c.l.b16 %v1436
  %v1509 = vunpack.c.l.b16 %v1437
  %v1510 = vunpack.c.l.b16 %v1438
  %v1511 = vunpack.c.l.b16 %v1439
  %v1512 = vunpack.c.l.b16 %v1440
  %v1513 = vunpack.c.l.b16 %v1441
  %v1514 = vunpack.c.l.b16 %v1442
  %v1515 = vunpack.c.l.b16 %v1443
  %v1516 = vunpack.c.l.b16 %v1444
  %v1517 = vunpack.c.l.b16 %v1445
  %v1518 = vunpack.c.l.b16 %v1446
  %v1519 = vunpack.c.l.b16 %v1447
  %v1520 = vunpack.c.l.b16 %v1448
  %v1521 = vunpack.c.l.b16 %v1449
  %v1522 = vunpack.c.l.b16 %v1450
  %v1523 = vunpack.c.l.b16 %v1451
  %v1524 = vunpack.c.l.b16 %v1452
  %v1525 = vunpack.c.l.b16 %v1453
  %v1526 = vunpack.c.l.b16 %v1454
  %v1527 = vunpack.c.l.b16 %v1455
  %v1528 = vunpack.c.l.b16 %v1456
  %v1529 = vunpack.c.l.b16 %v1457
  %v1530 = vunpack.c.l.b16 %v1458
  %v1531 = vpack.c.b16 %v1496, %v1495
  %v1532 = vpack.c.b16 %v1498, %v1497
  %v1533 = vpack.c.b16 %v1500, %v1499
  %v1534 = vpack.c.b16 %v1502, %v1501
  %v1535 = vpack.c.b16 %v1504, %v1503
  %v1536 = vpack.c.b16 %v1506, %v1505
  %v1537 = vpack.c.b16 %v1508, %v1507
  %v1538 = vpack.c.b16 %v1510, %v1509
  %v1539 = vpack.c.b16 %v1512, %v1511
  %v1540 = vpack.c.b16 %v1514, %v1513
  %v1541 = vpack.c.b16 %v1516, %v1515
  %v1542 = vpack.c.b16 %v1518, %v1517
  %v1543 = vpack.c.b16 %v1520, %v1519
  %v1544 = vpack.c.b16 %v1522, %v1521
  %v1545 = vpack.c.b16 %v1524, %v1523
  %v1546 = vpack.c.b16 %v1526, %v1525
  %v1547 = vpack.c.b16 %v1528, %v1527
  %v1548 = vpack.c.b16 %v1530, %v1529
  %vm1549 = vcmask 261120
  %v1551 = vsel %vm1549, %v1531, 0
  %v1554 = vsel %vm1549, %v1532, 0
  %v1557 = vsel %vm1549, %v1533, 0
  %v1560 = vsel %vm1549, %v1534, 0
  %v1563 = vsel %vm1549, %v1535, 0
  %v1566 = vsel %vm1549, %v1536, 0
  %v1569 = vsel %vm1549, %v1537, 0
  %v1572 = vsel %vm1549, %v1538, 0
  %v1575 = vsel %vm1549, %v1539, 0
  %v1578 = vsel %vm1549, %v1540, 0
  %v1581 = vsel %vm1549, %v1541, 0
  %v1584 = vsel %vm1549, %v1542, 0
  %v1587 = vsel %vm1549, %v1543, 0
  %v1590 = vsel %vm1549, %v1544, 0
  %v1593 = vsel %vm1549, %v1545, 0
  %v1596 = vsel %vm1549, %v1546, 0
  %v1599 = vsel %vm1549, %v1547, 0
  %v1602 = vsel %vm1549, %v1548, 0
  %1604 = vmatprep.subr.bf16.mxu0 0
  %1605 = vmatpush1.bf16.msra.mxu0 %v1421
  %1606 = vmatprep.subr.bf16.mxu0 0
  %1607 = vmatpush1.bf16.msra.mxu0 %v1422
  %1608 = vmatprep.subr.bf16.mxu0 0
  %1609 = vmatpush1.bf16.msra.mxu0 0
  %1610 = vmatprep.subr.bf16.mxu0 0
  %1611 = vmatpush1.bf16.msra.mxu0 0
  %1612 = vmatprep.subr.bf16.mxu0 0
  %1613 = vmatpush1.bf16.msra.mxu0 0
  %1614 = vmatprep.subr.bf16.mxu0 0
  %1615 = vmatpush1.bf16.msra.mxu0 0
  %1616 = vmatprep.subr.bf16.mxu0 0
  %1617 = vmatpush1.bf16.msra.mxu0 0
  %1618 = vmatprep.subr.bf16.mxu0 0
  %1619 = vmatpush1.bf16.msra.mxu0 0
  %1620 = vmatprep.subr.bf16.mxu0 0
  %1621 = vmatpush1.bf16.msra.mxu0 0
  %1622 = vmatprep.subr.bf16.mxu0 0
  %1623 = vmatpush1.bf16.msra.mxu0 0
  %1624 = vmatprep.subr.bf16.mxu0 0
  %1625 = vmatpush1.bf16.msra.mxu0 0
  %1626 = vmatprep.subr.bf16.mxu0 0
  %1627 = vmatpush1.bf16.msra.mxu0 0
  %1628 = vmatprep.subr.bf16.mxu0 0
  %1629 = vmatpush1.bf16.msra.mxu0 0
  %1630 = vmatprep.subr.bf16.mxu0 0
  %1631 = vmatpush1.bf16.msra.mxu0 0
  %1632 = vmatprep.subr.bf16.mxu0 0
  %1633 = vmatpush1.bf16.msra.mxu0 0
  %1634 = vmatprep.subr.bf16.mxu0 0
  %1635 = vmatpush1.bf16.msra.mxu0 0
  %1636 = vmatprep.mubr.bf16.mxu0 0
  %1637 = vmatmul.mubr.bf16.gmra.mrb[0].mxu0 %v1551
  %v1638 = vpop.f32.mrb[0].mxu0
  %v1639 = vadd.f32 0.0, %v1638
  %v1640 = vpop.f32.mrb[0].mxu0
  %v1641 = vpop.f32.mrb[0].mxu0
  %v1642 = vadd.f32 0.0, %v1641
  %v1643 = vpop.f32.mrb[0].mxu0
  %1644 = vmatprep.mubr.bf16.mxu0 0
  %1645 = vmatmul.mubr.bf16.gmra.mrb[0].mxu0 %v1554
  %v1646 = vpop.f32.mrb[0].mxu0
  %v1647 = vadd.f32 0.0, %v1646
  %v1648 = vpop.f32.mrb[0].mxu0
  %v1649 = vpop.f32.mrb[0].mxu0
  %v1650 = vadd.f32 0.0, %v1649
  %v1651 = vpop.f32.mrb[0].mxu0
  %1652 = vmatprep.mubr.bf16.mxu0 0
  %1653 = vmatmul.mubr.bf16.gmra.mrb[0].mxu0 %v1557
  %v1654 = vpop.f32.mrb[0].mxu0
  %v1655 = vadd.f32 0.0, %v1654
  %v1656 = vpop.f32.mrb[0].mxu0
  %v1657 = vpop.f32.mrb[0].mxu0
  %v1658 = vadd.f32 0.0, %v1657
  %v1659 = vpop.f32.mrb[0].mxu0
  %1660 = vmatprep.mubr.bf16.mxu0 0
  %1661 = vmatmul.mubr.bf16.gmra.mrb[0].mxu0 %v1560
  %v1662 = vpop.f32.mrb[0].mxu0
  %v1663 = vadd.f32 0.0, %v1662
  %v1664 = vpop.f32.mrb[0].mxu0
  %v1665 = vpop.f32.mrb[0].mxu0
  %v1666 = vadd.f32 0.0, %v1665
  %v1667 = vpop.f32.mrb[0].mxu0
  %1668 = vmatprep.mubr.bf16.mxu0 0
  %1669 = vmatmul.mubr.bf16.gmra.mrb[0].mxu0 %v1563
  %v1670 = vpop.f32.mrb[0].mxu0
  %v1671 = vadd.f32 0.0, %v1670
  %v1672 = vpop.f32.mrb[0].mxu0
  %v1673 = vpop.f32.mrb[0].mxu0
  %v1674 = vadd.f32 0.0, %v1673
  %v1675 = vpop.f32.mrb[0].mxu0
  %1676 = vmatprep.mubr.bf16.mxu0 0
  %1677 = vmatmul.mubr.bf16.gmra.mrb[0].mxu0 %v1566
  %v1678 = vpop.f32.mrb[0].mxu0
  %v1679 = vadd.f32 0.0, %v1678
  %v1680 = vpop.f32.mrb[0].mxu0
  %v1681 = vpop.f32.mrb[0].mxu0
  %v1682 = vadd.f32 0.0, %v1681
  %v1683 = vpop.f32.mrb[0].mxu0
  %1684 = vmatprep.mubr.bf16.mxu0 0
  %1685 = vmatmul.mubr.bf16.gmra.mrb[0].mxu0 %v1569
  %v1686 = vpop.f32.mrb[0].mxu0
  %v1687 = vadd.f32 0.0, %v1686
  %v1688 = vpop.f32.mrb[0].mxu0
  %v1689 = vpop.f32.mrb[0].mxu0
  %v1690 = vadd.f32 0.0, %v1689
  %v1691 = vpop.f32.mrb[0].mxu0
  %1692 = vmatprep.mubr.bf16.mxu0 0
  %1693 = vmatmul.mubr.bf16.gmra.mrb[0].mxu0 %v1572
  %v1694 = vpop.f32.mrb[0].mxu0
  %v1695 = vadd.f32 0.0, %v1694
  %v1696 = vpop.f32.mrb[0].mxu0
  %v1697 = vpop.f32.mrb[0].mxu0
  %v1698 = vadd.f32 0.0, %v1697
  %v1699 = vpop.f32.mrb[0].mxu0
  %1700 = vmatprep.mubr.bf16.mxu0 0
  %1701 = vmatmul.mubr.bf16.gmra.mrb[0].mxu0 %v1575
  %v1702 = vpop.f32.mrb[0].mxu0
  %v1703 = vadd.f32 0.0, %v1702
  %v1704 = vpop.f32.mrb[0].mxu0
  %v1705 = vpop.f32.mrb[0].mxu0
  %v1706 = vadd.f32 0.0, %v1705
  %v1707 = vpop.f32.mrb[0].mxu0
  %1708 = vmatprep.mubr.bf16.mxu0 0
  %1709 = vmatmul.mubr.bf16.gmra.mrb[0].mxu0 %v1578
  %v1710 = vpop.f32.mrb[0].mxu0
  %v1711 = vadd.f32 0.0, %v1710
  %v1712 = vpop.f32.mrb[0].mxu0
  %v1713 = vpop.f32.mrb[0].mxu0
  %v1714 = vadd.f32 0.0, %v1713
  %v1715 = vpop.f32.mrb[0].mxu0
  %1716 = vmatprep.mubr.bf16.mxu0 0
  %1717 = vmatmul.mubr.bf16.gmra.mrb[0].mxu0 %v1581
  %v1718 = vpop.f32.mrb[0].mxu0
  %v1719 = vadd.f32 0.0, %v1718
  %v1720 = vpop.f32.mrb[0].mxu0
  %v1721 = vpop.f32.mrb[0].mxu0
  %v1722 = vadd.f32 0.0, %v1721
  %v1723 = vpop.f32.mrb[0].mxu0
  %1724 = vmatprep.mubr.bf16.mxu0 0
  %1725 = vmatmul.mubr.bf16.gmra.mrb[0].mxu0 %v1584
  %v1726 = vpop.f32.mrb[0].mxu0
  %v1727 = vadd.f32 0.0, %v1726
  %v1728 = vpop.f32.mrb[0].mxu0
  %v1729 = vpop.f32.mrb[0].mxu0
  %v1730 = vadd.f32 0.0, %v1729
  %v1731 = vpop.f32.mrb[0].mxu0
  %1732 = vmatprep.mubr.bf16.mxu0 0
  %1733 = vmatmul.mubr.bf16.gmra.mrb[0].mxu0 %v1587
  %v1734 = vpop.f32.mrb[0].mxu0
  %v1735 = vadd.f32 0.0, %v1734
  %v1736 = vpop.f32.mrb[0].mxu0
  %v1737 = vpop.f32.mrb[0].mxu0
  %v1738 = vadd.f32 0.0, %v1737
  %v1739 = vpop.f32.mrb[0].mxu0
  %1740 = vmatprep.mubr.bf16.mxu0 0
  %1741 = vmatmul.mubr.bf16.gmra.mrb[0].mxu0 %v1590
  %v1742 = vpop.f32.mrb[0].mxu0
  %v1743 = vadd.f32 0.0, %v1742
  %v1744 = vpop.f32.mrb[0].mxu0
  %v1745 = vpop.f32.mrb[0].mxu0
  %v1746 = vadd.f32 0.0, %v1745
  %v1747 = vpop.f32.mrb[0].mxu0
  %1748 = vmatprep.mubr.bf16.mxu0 0
  %1749 = vmatmul.mubr.bf16.gmra.mrb[0].mxu0 %v1593
  %v1750 = vpop.f32.mrb[0].mxu0
  %v1751 = vadd.f32 0.0, %v1750
  %v1752 = vpop.f32.mrb[0].mxu0
  %v1753 = vpop.f32.mrb[0].mxu0
  %v1754 = vadd.f32 0.0, %v1753
  %v1755 = vpop.f32.mrb[0].mxu0
  %1756 = vmatprep.mubr.bf16.mxu0 0
  %1757 = vmatmul.mubr.bf16.gmra.mrb[0].mxu0 %v1596
  %v1758 = vpop.f32.mrb[0].mxu0
  %v1759 = vadd.f32 0.0, %v1758
  %v1760 = vpop.f32.mrb[0].mxu0
  %v1761 = vpop.f32.mrb[0].mxu0
  %v1762 = vadd.f32 0.0, %v1761
  %v1763 = vpop.f32.mrb[0].mxu0
  %1764 = vmatprep.mubr.bf16.mxu0 0
  %1765 = vmatmul.mubr.bf16.gmra.mrb[0].mxu0 %v1599
  %v1766 = vpop.f32.mrb[0].mxu0
  %v1767 = vadd.f32 0.0, %v1766
  %v1768 = vpop.f32.mrb[0].mxu0
  %v1769 = vpop.f32.mrb[0].mxu0
  %v1770 = vadd.f32 0.0, %v1769
  %v1771 = vpop.f32.mrb[0].mxu0
  %1772 = vmatprep.mubr.bf16.mxu0 0
  %1773 = vmatmul.mubr.bf16.gmra.mrb[0].mxu0 %v1602
  %v1774 = vpop.f32.mrb[0].mxu0
  %v1775 = vadd.f32 0.0, %v1774
  %v1776 = vpop.f32.mrb[0].mxu0
  %v1777 = vpop.f32.mrb[0].mxu0
  %v1778 = vadd.f32 0.0, %v1777
  %v1779 = vpop.f32.mrb[0].mxu0
  %1780 = vdwg.mxu0
  %v1781 = vpack.c.bf16 %v1642, %v1639
  %v1782 = vpack.c.bf16 %v1650, %v1647
  %v1783 = vpack.c.bf16 %v1658, %v1655
  %v1784 = vpack.c.bf16 %v1666, %v1663
  %v1785 = vpack.c.bf16 %v1674, %v1671
  %v1786 = vpack.c.bf16 %v1682, %v1679
  %v1787 = vpack.c.bf16 %v1690, %v1687
  %v1788 = vpack.c.bf16 %v1698, %v1695
  %v1789 = vpack.c.bf16 %v1706, %v1703
  %v1790 = vpack.c.bf16 %v1714, %v1711
  %v1791 = vpack.c.bf16 %v1722, %v1719
  %v1792 = vpack.c.bf16 %v1730, %v1727
  %v1793 = vpack.c.bf16 %v1738, %v1735
  %v1794 = vpack.c.bf16 %v1746, %v1743
  %v1795 = vpack.c.bf16 %v1754, %v1751
  %v1796 = vpack.c.bf16 %v1762, %v1759
  %v1797 = vpack.c.bf16 %v1770, %v1767
  %v1798 = vpack.c.bf16 %v1778, %v1775
  %v1799 = vld [vmem:[%s9] sm:$0xf]
  %v1800 = vld [vmem:[%s9 + $0x4] sm:$0xf]
  %s1801 = scalar_lea.vmem %s9, 8
  %v1802 = vld [vmem:[%s1801] sm:$0xf]
  %v1803 = vld [vmem:[%s1801 + $0x4] sm:$0xf]
  %v1806 = vunpack.c.l.b16 %v1802
  %v1807 = vunpack.c.l.b16 %v1803
  %v1808 = vpack.c.b16 %v1807, %v1806
  %v1811 = vsel %vm1341, %v1783, 0
  %v1814 = vsel %vm1341, %v1784, 0
  %1816 = vmatprep.subr.bf16.mxu0 0
  %1817 = vmatpush1.bf16.msra.mxu0 %v1808
  %1818 = vmatprep.subr.bf16.mxu0 0
  %1819 = vmatpush1.bf16.msra.mxu0 0
  %1820 = vmatprep.subr.bf16.mxu0 0
  %1821 = vmatpush1.bf16.msra.mxu0 0
  %1822 = vmatprep.subr.bf16.mxu0 0
  %1823 = vmatpush1.bf16.msra.mxu0 0
  %1824 = vmatprep.subr.bf16.mxu0 0
  %1825 = vmatpush1.bf16.msra.mxu0 0
  %1826 = vmatprep.subr.bf16.mxu0 0
  %1827 = vmatpush1.bf16.msra.mxu0 0
  %1828 = vmatprep.subr.bf16.mxu0 0
  %1829 = vmatpush1.bf16.msra.mxu0 0
  %1830 = vmatprep.subr.bf16.mxu0 0
  %1831 = vmatpush1.bf16.msra.mxu0 0
  %1832 = vmatprep.subr.bf16.mxu0 0
  %1833 = vmatpush1.bf16.msra.mxu0 0
  %1834 = vmatprep.subr.bf16.mxu0 0
  %1835 = vmatpush1.bf16.msra.mxu0 0
  %1836 = vmatprep.subr.bf16.mxu0 0
  %1837 = vmatpush1.bf16.msra.mxu0 0
  %1838 = vmatprep.subr.bf16.mxu0 0
  %1839 = vmatpush1.bf16.msra.mxu0 0
  %1840 = vmatprep.subr.bf16.mxu0 0
  %1841 = vmatpush1.bf16.msra.mxu0 0
  %1842 = vmatprep.subr.bf16.mxu0 0
  %1843 = vmatpush1.bf16.msra.mxu0 0
  %1844 = vmatprep.subr.bf16.mxu0 0
  %1845 = vmatpush1.bf16.msra.mxu0 0
  %1846 = vmatprep.subr.bf16.mxu0 0
  %1847 = vmatpush1.bf16.msra.mxu0 0
  %1848 = vmatprep.mubr.bf16.mxu0 0
  %1849 = vmatmul.mubr.bf16.gmra.mrb[0].mxu0 %v1811
  %v1850 = vpop.f32.mrb[0].mxu0
  %v1851 = vadd.f32 0.0, %v1850
  %v1852 = vpop.f32.mrb[0].mxu0
  %v1853 = vpop.f32.mrb[0].mxu0
  %v1854 = vadd.f32 0.0, %v1853
  %v1855 = vpop.f32.mrb[0].mxu0
  %1856 = vmatprep.mubr.bf16.mxu0 0
  %1857 = vmatmul.mubr.bf16.gmra.mrb[0].mxu0 %v1814
  %v1858 = vpop.f32.mrb[0].mxu0
  %v1859 = vadd.f32 0.0, %v1858
  %v1860 = vpop.f32.mrb[0].mxu0
  %v1861 = vpop.f32.mrb[0].mxu0
  %v1862 = vadd.f32 0.0, %v1861
  %v1863 = vpop.f32.mrb[0].mxu0
  %1864 = vdwg.mxu0
  %v1867 = vunpack.c.l.b16 %v1799
  %v1868 = vunpack.c.l.b16 %v1800
  %v1869 = vpack.c.b16 %v1868, %v1867
  %v1872 = vsel %vm1341, %v1781, 0
  %v1875 = vsel %vm1341, %v1782, 0
  %1877 = vmatprep.subr.bf16.mxu0 0
  %1878 = vmatpush1.bf16.msra.mxu0 %v1869
  %1879 = vmatprep.subr.bf16.mxu0 0
  %1880 = vmatpush1.bf16.msra.mxu0 0
  %1881 = vmatprep.subr.bf16.mxu0 0
  %1882 = vmatpush1.bf16.msra.mxu0 0
  %1883 = vmatprep.subr.bf16.mxu0 0
  %1884 = vmatpush1.bf16.msra.mxu0 0
  %1885 = vmatprep.subr.bf16.mxu0 0
  %1886 = vmatpush1.bf16.msra.mxu0 0
  %1887 = vmatprep.subr.bf16.mxu0 0
  %1888 = vmatpush1.bf16.msra.mxu0 0
  %1889 = vmatprep.subr.bf16.mxu0 0
  %1890 = vmatpush1.bf16.msra.mxu0 0
  %1891 = vmatprep.subr.bf16.mxu0 0
  %1892 = vmatpush1.bf16.msra.mxu0 0
  %1893 = vmatprep.subr.bf16.mxu0 0
  %1894 = vmatpush1.bf16.msra.mxu0 0
  %1895 = vmatprep.subr.bf16.mxu0 0
  %1896 = vmatpush1.bf16.msra.mxu0 0
  %1897 = vmatprep.subr.bf16.mxu0 0
  %1898 = vmatpush1.bf16.msra.mxu0 0
  %1899 = vmatprep.subr.bf16.mxu0 0
  %1900 = vmatpush1.bf16.msra.mxu0 0
  %1901 = vmatprep.subr.bf16.mxu0 0
  %1902 = vmatpush1.bf16.msra.mxu0 0
  %1903 = vmatprep.subr.bf16.mxu0 0
  %1904 = vmatpush1.bf16.msra.mxu0 0
  %1905 = vmatprep.subr.bf16.mxu0 0
  %1906 = vmatpush1.bf16.msra.mxu0 0
  %1907 = vmatprep.subr.bf16.mxu0 0
  %1908 = vmatpush1.bf16.msra.mxu0 0
  %1909 = vmatprep.mubr.bf16.mxu0 0
  %1910 = vmatmul.mubr.bf16.gmra.mrb[0].mxu0 %v1872
  %v1911 = vpop.f32.mrb[0].mxu0
  %v1912 = vadd.f32 %v1851, %v1911
  %v1913 = vpop.f32.mrb[0].mxu0
  %v1914 = vpop.f32.mrb[0].mxu0
  %v1915 = vadd.f32 %v1854, %v1914
  %v1916 = vpop.f32.mrb[0].mxu0
  %1917 = vmatprep.mubr.bf16.mxu0 0
  %1918 = vmatmul.mubr.bf16.gmra.mrb[0].mxu0 %v1875
  %v1919 = vpop.f32.mrb[0].mxu0
  %v1920 = vadd.f32 %v1859, %v1919
  %v1921 = vpop.f32.mrb[0].mxu0
  %v1922 = vpop.f32.mrb[0].mxu0
  %v1923 = vadd.f32 %v1862, %v1922
  %v1924 = vpop.f32.mrb[0].mxu0
  %1925 = vdwg.mxu0
  %s1926 = scalar_lea.vmem %s9, 16
  %v1927 = vld [vmem:[%s1926] sm:$0xf]
  %v1928 = vld [vmem:[%s1926 + $0x4] sm:$0xf]
  %v1931 = vunpack.c.l.b16 %v1927
  %v1932 = vunpack.c.l.b16 %v1928
  %v1933 = vpack.c.b16 %v1932, %v1931
  %v1936 = vsel %vm1341, %v1785, 0
  %v1939 = vsel %vm1341, %v1786, 0
  %1941 = vmatprep.subr.bf16.mxu0 0
  %1942 = vmatpush1.bf16.msra.mxu0 %v1933
  %1943 = vmatprep.subr.bf16.mxu0 0
  %1944 = vmatpush1.bf16.msra.mxu0 0
  %1945 = vmatprep.subr.bf16.mxu0 0
  %1946 = vmatpush1.bf16.msra.mxu0 0
  %1947 = vmatprep.subr.bf16.mxu0 0
  %1948 = vmatpush1.bf16.msra.mxu0 0
  %1949 = vmatprep.subr.bf16.mxu0 0
  %1950 = vmatpush1.bf16.msra.mxu0 0
  %1951 = vmatprep.subr.bf16.mxu0 0
  %1952 = vmatpush1.bf16.msra.mxu0 0
  %1953 = vmatprep.subr.bf16.mxu0 0
  %1954 = vmatpush1.bf16.msra.mxu0 0
  %1955 = vmatprep.subr.bf16.mxu0 0
  %1956 = vmatpush1.bf16.msra.mxu0 0
  %1957 = vmatprep.subr.bf16.mxu0 0
  %1958 = vmatpush1.bf16.msra.mxu0 0
  %1959 = vmatprep.subr.bf16.mxu0 0
  %1960 = vmatpush1.bf16.msra.mxu0 0
  %1961 = vmatprep.subr.bf16.mxu0 0
  %1962 = vmatpush1.bf16.msra.mxu0 0
  %1963 = vmatprep.subr.bf16.mxu0 0
  %1964 = vmatpush1.bf16.msra.mxu0 0
  %1965 = vmatprep.subr.bf16.mxu0 0
  %1966 = vmatpush1.bf16.msra.mxu0 0
  %1967 = vmatprep.subr.bf16.mxu0 0
  %1968 = vmatpush1.bf16.msra.mxu0 0
  %1969 = vmatprep.subr.bf16.mxu0 0
  %1970 = vmatpush1.bf16.msra.mxu0 0
  %1971 = vmatprep.subr.bf16.mxu0 0
  %1972 = vmatpush1.bf16.msra.mxu0 0
  %1973 = vmatprep.mubr.bf16.mxu0 0
  %1974 = vmatmul.mubr.bf16.gmra.mrb[0].mxu0 %v1936
  %v1975 = vpop.f32.mrb[0].mxu0
  %v1976 = vadd.f32 0.0, %v1975
  %v1977 = vpop.f32.mrb[0].mxu0
  %v1978 = vpop.f32.mrb[0].mxu0
  %v1979 = vadd.f32 0.0, %v1978
  %v1980 = vpop.f32.mrb[0].mxu0
  %1981 = vmatprep.mubr.bf16.mxu0 0
  %1982 = vmatmul.mubr.bf16.gmra.mrb[0].mxu0 %v1939
  %v1983 = vpop.f32.mrb[0].mxu0
  %v1984 = vadd.f32 0.0, %v1983
  %v1985 = vpop.f32.mrb[0].mxu0
  %v1986 = vpop.f32.mrb[0].mxu0
  %v1987 = vadd.f32 0.0, %v1986
  %v1988 = vpop.f32.mrb[0].mxu0
  %1989 = vdwg.mxu0
  %v1990 = vadd.f32 %v1912, %v1976
  %v1991 = vadd.f32 %v1915, %v1979
  %v1992 = vadd.f32 %v1920, %v1984
  %v1993 = vadd.f32 %v1923, %v1987
  %s1994 = scalar_lea.vmem %s9, 24
  %v1995 = vld [vmem:[%s1994] sm:$0xf]
  %v1996 = vld [vmem:[%s1994 + $0x4] sm:$0xf]
  %v1999 = vunpack.c.l.b16 %v1995
  %v2000 = vunpack.c.l.b16 %v1996
  %v2001 = vpack.c.b16 %v2000, %v1999
  %v2004 = vsel %vm1341, %v1787, 0
  %v2007 = vsel %vm1341, %v1788, 0
  %2009 = vmatprep.subr.bf16.mxu0 0
  %2010 = vmatpush1.bf16.msra.mxu0 %v2001
  %2011 = vmatprep.subr.bf16.mxu0 0
  %2012 = vmatpush1.bf16.msra.mxu0 0
  %2013 = vmatprep.subr.bf16.mxu0 0
  %2014 = vmatpush1.bf16.msra.mxu0 0
  %2015 = vmatprep.subr.bf16.mxu0 0
  %2016 = vmatpush1.bf16.msra.mxu0 0
  %2017 = vmatprep.subr.bf16.mxu0 0
  %2018 = vmatpush1.bf16.msra.mxu0 0
  %2019 = vmatprep.subr.bf16.mxu0 0
  %2020 = vmatpush1.bf16.msra.mxu0 0
  %2021 = vmatprep.subr.bf16.mxu0 0
  %2022 = vmatpush1.bf16.msra.mxu0 0
  %2023 = vmatprep.subr.bf16.mxu0 0
  %2024 = vmatpush1.bf16.msra.mxu0 0
  %2025 = vmatprep.subr.bf16.mxu0 0
  %2026 = vmatpush1.bf16.msra.mxu0 0
  %2027 = vmatprep.subr.bf16.mxu0 0
  %2028 = vmatpush1.bf16.msra.mxu0 0
  %2029 = vmatprep.subr.bf16.mxu0 0
  %2030 = vmatpush1.bf16.msra.mxu0 0
  %2031 = vmatprep.subr.bf16.mxu0 0
  %2032 = vmatpush1.bf16.msra.mxu0 0
  %2033 = vmatprep.subr.bf16.mxu0 0
  %2034 = vmatpush1.bf16.msra.mxu0 0
  %2035 = vmatprep.subr.bf16.mxu0 0
  %2036 = vmatpush1.bf16.msra.mxu0 0
  %2037 = vmatprep.subr.bf16.mxu0 0
  %2038 = vmatpush1.bf16.msra.mxu0 0
  %2039 = vmatprep.subr.bf16.mxu0 0
  %2040 = vmatpush1.bf16.msra.mxu0 0
  %2041 = vmatprep.mubr.bf16.mxu0 0
  %2042 = vmatmul.mubr.bf16.gmra.mrb[0].mxu0 %v2004
  %v2043 = vpop.f32.mrb[0].mxu0
  %v2044 = vadd.f32 0.0, %v2043
  %v2045 = vpop.f32.mrb[0].mxu0
  %v2046 = vpop.f32.mrb[0].mxu0
  %v2047 = vadd.f32 0.0, %v2046
  %v2048 = vpop.f32.mrb[0].mxu0
  %2049 = vmatprep.mubr.bf16.mxu0 0
  %2050 = vmatmul.mubr.bf16.gmra.mrb[0].mxu0 %v2007
  %v2051 = vpop.f32.mrb[0].mxu0
  %v2052 = vadd.f32 0.0, %v2051
  %v2053 = vpop.f32.mrb[0].mxu0
  %v2054 = vpop.f32.mrb[0].mxu0
  %v2055 = vadd.f32 0.0, %v2054
  %v2056 = vpop.f32.mrb[0].mxu0
  %2057 = vdwg.mxu0
  %v2058 = vadd.f32 %v1990, %v2044
  %v2059 = vadd.f32 %v1991, %v2047
  %v2060 = vadd.f32 %v1992, %v2052
  %v2061 = vadd.f32 %v1993, %v2055
  %s2062 = scalar_lea.vmem %s9, 32
  %v2063 = vld [vmem:[%s2062] sm:$0xf]
  %v2064 = vld [vmem:[%s2062 + $0x4] sm:$0xf]
  %v2067 = vunpack.c.l.b16 %v2063
  %v2068 = vunpack.c.l.b16 %v2064
  %v2069 = vpack.c.b16 %v2068, %v2067
  %v2072 = vsel %vm1341, %v1789, 0
  %v2075 = vsel %vm1341, %v1790, 0
  %2077 = vmatprep.subr.bf16.mxu0 0
  %2078 = vmatpush1.bf16.msra.mxu0 %v2069
  %2079 = vmatprep.subr.bf16.mxu0 0
  %2080 = vmatpush1.bf16.msra.mxu0 0
  %2081 = vmatprep.subr.bf16.mxu0 0
  %2082 = vmatpush1.bf16.msra.mxu0 0
  %2083 = vmatprep.subr.bf16.mxu0 0
  %2084 = vmatpush1.bf16.msra.mxu0 0
  %2085 = vmatprep.subr.bf16.mxu0 0
  %2086 = vmatpush1.bf16.msra.mxu0 0
  %2087 = vmatprep.subr.bf16.mxu0 0
  %2088 = vmatpush1.bf16.msra.mxu0 0
  %2089 = vmatprep.subr.bf16.mxu0 0
  %2090 = vmatpush1.bf16.msra.mxu0 0
  %2091 = vmatprep.subr.bf16.mxu0 0
  %2092 = vmatpush1.bf16.msra.mxu0 0
  %2093 = vmatprep.subr.bf16.mxu0 0
  %2094 = vmatpush1.bf16.msra.mxu0 0
  %2095 = vmatprep.subr.bf16.mxu0 0
  %2096 = vmatpush1.bf16.msra.mxu0 0
  %2097 = vmatprep.subr.bf16.mxu0 0
  %2098 = vmatpush1.bf16.msra.mxu0 0
  %2099 = vmatprep.subr.bf16.mxu0 0
  %2100 = vmatpush1.bf16.msra.mxu0 0
  %2101 = vmatprep.subr.bf16.mxu0 0
  %2102 = vmatpush1.bf16.msra.mxu0 0
  %2103 = vmatprep.subr.bf16.mxu0 0
  %2104 = vmatpush1.bf16.msra.mxu0 0
  %2105 = vmatprep.subr.bf16.mxu0 0
  %2106 = vmatpush1.bf16.msra.mxu0 0
  %2107 = vmatprep.subr.bf16.mxu0 0
  %2108 = vmatpush1.bf16.msra.mxu0 0
  %2109 = vmatprep.mubr.bf16.mxu0 0
  %2110 = vmatmul.mubr.bf16.gmra.mrb[0].mxu0 %v2072
  %v2111 = vpop.f32.mrb[0].mxu0
  %v2112 = vadd.f32 0.0, %v2111
  %v2113 = vpop.f32.mrb[0].mxu0
  %v2114 = vpop.f32.mrb[0].mxu0
  %v2115 = vadd.f32 0.0, %v2114
  %v2116 = vpop.f32.mrb[0].mxu0
  %2117 = vmatprep.mubr.bf16.mxu0 0
  %2118 = vmatmul.mubr.bf16.gmra.mrb[0].mxu0 %v2075
  %v2119 = vpop.f32.mrb[0].mxu0
  %v2120 = vadd.f32 0.0, %v2119
  %v2121 = vpop.f32.mrb[0].mxu0
  %v2122 = vpop.f32.mrb[0].mxu0
  %v2123 = vadd.f32 0.0, %v2122
  %v2124 = vpop.f32.mrb[0].mxu0
  %2125 = vdwg.mxu0
  %v2126 = vadd.f32 %v2058, %v2112
  %v2127 = vadd.f32 %v2059, %v2115
  %v2128 = vadd.f32 %v2060, %v2120
  %v2129 = vadd.f32 %v2061, %v2123
  %s2130 = scalar_lea.vmem %s9, 40
  %v2131 = vld [vmem:[%s2130] sm:$0xf]
  %v2132 = vld [vmem:[%s2130 + $0x4] sm:$0xf]
  %v2135 = vunpack.c.l.b16 %v2131
  %v2136 = vunpack.c.l.b16 %v2132
  %v2137 = vpack.c.b16 %v2136, %v2135
  %v2140 = vsel %vm1341, %v1791, 0
  %v2143 = vsel %vm1341, %v1792, 0
  %2145 = vmatprep.subr.bf16.mxu0 0
  %2146 = vmatpush1.bf16.msra.mxu0 %v2137
  %2147 = vmatprep.subr.bf16.mxu0 0
  %2148 = vmatpush1.bf16.msra.mxu0 0
  %2149 = vmatprep.subr.bf16.mxu0 0
  %2150 = vmatpush1.bf16.msra.mxu0 0
  %2151 = vmatprep.subr.bf16.mxu0 0
  %2152 = vmatpush1.bf16.msra.mxu0 0
  %2153 = vmatprep.subr.bf16.mxu0 0
  %2154 = vmatpush1.bf16.msra.mxu0 0
  %2155 = vmatprep.subr.bf16.mxu0 0
  %2156 = vmatpush1.bf16.msra.mxu0 0
  %2157 = vmatprep.subr.bf16.mxu0 0
  %2158 = vmatpush1.bf16.msra.mxu0 0
  %2159 = vmatprep.subr.bf16.mxu0 0
  %2160 = vmatpush1.bf16.msra.mxu0 0
  %2161 = vmatprep.subr.bf16.mxu0 0
  %2162 = vmatpush1.bf16.msra.mxu0 0
  %2163 = vmatprep.subr.bf16.mxu0 0
  %2164 = vmatpush1.bf16.msra.mxu0 0
  %2165 = vmatprep.subr.bf16.mxu0 0
  %2166 = vmatpush1.bf16.msra.mxu0 0
  %2167 = vmatprep.subr.bf16.mxu0 0
  %2168 = vmatpush1.bf16.msra.mxu0 0
  %2169 = vmatprep.subr.bf16.mxu0 0
  %2170 = vmatpush1.bf16.msra.mxu0 0
  %2171 = vmatprep.subr.bf16.mxu0 0
  %2172 = vmatpush1.bf16.msra.mxu0 0
  %2173 = vmatprep.subr.bf16.mxu0 0
  %2174 = vmatpush1.bf16.msra.mxu0 0
  %2175 = vmatprep.subr.bf16.mxu0 0
  %2176 = vmatpush1.bf16.msra.mxu0 0
  %2177 = vmatprep.mubr.bf16.mxu0 0
  %2178 = vmatmul.mubr.bf16.gmra.mrb[0].mxu0 %v2140
  %v2179 = vpop.f32.mrb[0].mxu0
  %v2180 = vadd.f32 0.0, %v2179
  %v2181 = vpop.f32.mrb[0].mxu0
  %v2182 = vpop.f32.mrb[0].mxu0
  %v2183 = vadd.f32 0.0, %v2182
  %v2184 = vpop.f32.mrb[0].mxu0
  %2185 = vmatprep.mubr.bf16.mxu0 0
  %2186 = vmatmul.mubr.bf16.gmra.mrb[0].mxu0 %v2143
  %v2187 = vpop.f32.mrb[0].mxu0
  %v2188 = vadd.f32 0.0, %v2187
  %v2189 = vpop.f32.mrb[0].mxu0
  %v2190 = vpop.f32.mrb[0].mxu0
  %v2191 = vadd.f32 0.0, %v2190
  %v2192 = vpop.f32.mrb[0].mxu0
  %2193 = vdwg.mxu0
  %v2194 = vadd.f32 %v2126, %v2180
  %v2195 = vadd.f32 %v2127, %v2183
  %v2196 = vadd.f32 %v2128, %v2188
  %v2197 = vadd.f32 %v2129, %v2191
  %s2198 = scalar_lea.vmem %s9, 48
  %v2199 = vld [vmem:[%s2198] sm:$0xf]
  %v2200 = vld [vmem:[%s2198 + $0x4] sm:$0xf]
  %v2203 = vunpack.c.l.b16 %v2199
  %v2204 = vunpack.c.l.b16 %v2200
  %v2205 = vpack.c.b16 %v2204, %v2203
  %v2208 = vsel %vm1341, %v1793, 0
  %v2211 = vsel %vm1341, %v1794, 0
  %2213 = vmatprep.subr.bf16.mxu0 0
  %2214 = vmatpush1.bf16.msra.mxu0 %v2205
  %2215 = vmatprep.subr.bf16.mxu0 0
  %2216 = vmatpush1.bf16.msra.mxu0 0
  %2217 = vmatprep.subr.bf16.mxu0 0
  %2218 = vmatpush1.bf16.msra.mxu0 0
  %2219 = vmatprep.subr.bf16.mxu0 0
  %2220 = vmatpush1.bf16.msra.mxu0 0
  %2221 = vmatprep.subr.bf16.mxu0 0
  %2222 = vmatpush1.bf16.msra.mxu0 0
  %2223 = vmatprep.subr.bf16.mxu0 0
  %2224 = vmatpush1.bf16.msra.mxu0 0
  %2225 = vmatprep.subr.bf16.mxu0 0
  %2226 = vmatpush1.bf16.msra.mxu0 0
  %2227 = vmatprep.subr.bf16.mxu0 0
  %2228 = vmatpush1.bf16.msra.mxu0 0
  %2229 = vmatprep.subr.bf16.mxu0 0
  %2230 = vmatpush1.bf16.msra.mxu0 0
  %2231 = vmatprep.subr.bf16.mxu0 0
  %2232 = vmatpush1.bf16.msra.mxu0 0
  %2233 = vmatprep.subr.bf16.mxu0 0
  %2234 = vmatpush1.bf16.msra.mxu0 0
  %2235 = vmatprep.subr.bf16.mxu0 0
  %2236 = vmatpush1.bf16.msra.mxu0 0
  %2237 = vmatprep.subr.bf16.mxu0 0
  %2238 = vmatpush1.bf16.msra.mxu0 0
  %2239 = vmatprep.subr.bf16.mxu0 0
  %2240 = vmatpush1.bf16.msra.mxu0 0
  %2241 = vmatprep.subr.bf16.mxu0 0
  %2242 = vmatpush1.bf16.msra.mxu0 0
  %2243 = vmatprep.subr.bf16.mxu0 0
  %2244 = vmatpush1.bf16.msra.mxu0 0
  %2245 = vmatprep.mubr.bf16.mxu0 0
  %2246 = vmatmul.mubr.bf16.gmra.mrb[0].mxu0 %v2208
  %v2247 = vpop.f32.mrb[0].mxu0
  %v2248 = vadd.f32 0.0, %v2247
  %v2249 = vpop.f32.mrb[0].mxu0
  %v2250 = vpop.f32.mrb[0].mxu0
  %v2251 = vadd.f32 0.0, %v2250
  %v2252 = vpop.f32.mrb[0].mxu0
  %2253 = vmatprep.mubr.bf16.mxu0 0
  %2254 = vmatmul.mubr.bf16.gmra.mrb[0].mxu0 %v2211
  %v2255 = vpop.f32.mrb[0].mxu0
  %v2256 = vadd.f32 0.0, %v2255
  %v2257 = vpop.f32.mrb[0].mxu0
  %v2258 = vpop.f32.mrb[0].mxu0
  %v2259 = vadd.f32 0.0, %v2258
  %v2260 = vpop.f32.mrb[0].mxu0
  %2261 = vdwg.mxu0
  %v2262 = vadd.f32 %v2194, %v2248
  %v2263 = vadd.f32 %v2195, %v2251
  %v2264 = vadd.f32 %v2196, %v2256
  %v2265 = vadd.f32 %v2197, %v2259
  %s2266 = scalar_lea.vmem %s9, 56
  %v2267 = vld [vmem:[%s2266] sm:$0xf]
  %v2268 = vld [vmem:[%s2266 + $0x4] sm:$0xf]
  %v2271 = vunpack.c.l.b16 %v2267
  %v2272 = vunpack.c.l.b16 %v2268
  %v2273 = vpack.c.b16 %v2272, %v2271
  %v2276 = vsel %vm1341, %v1795, 0
  %v2279 = vsel %vm1341, %v1796, 0
  %2281 = vmatprep.subr.bf16.mxu0 0
  %2282 = vmatpush1.bf16.msra.mxu0 %v2273
  %2283 = vmatprep.subr.bf16.mxu0 0
  %2284 = vmatpush1.bf16.msra.mxu0 0
  %2285 = vmatprep.subr.bf16.mxu0 0
  %2286 = vmatpush1.bf16.msra.mxu0 0
  %2287 = vmatprep.subr.bf16.mxu0 0
  %2288 = vmatpush1.bf16.msra.mxu0 0
  %2289 = vmatprep.subr.bf16.mxu0 0
  %2290 = vmatpush1.bf16.msra.mxu0 0
  %2291 = vmatprep.subr.bf16.mxu0 0
  %2292 = vmatpush1.bf16.msra.mxu0 0
  %2293 = vmatprep.subr.bf16.mxu0 0
  %2294 = vmatpush1.bf16.msra.mxu0 0
  %2295 = vmatprep.subr.bf16.mxu0 0
  %2296 = vmatpush1.bf16.msra.mxu0 0
  %2297 = vmatprep.subr.bf16.mxu0 0
  %2298 = vmatpush1.bf16.msra.mxu0 0
  %2299 = vmatprep.subr.bf16.mxu0 0
  %2300 = vmatpush1.bf16.msra.mxu0 0
  %2301 = vmatprep.subr.bf16.mxu0 0
  %2302 = vmatpush1.bf16.msra.mxu0 0
  %2303 = vmatprep.subr.bf16.mxu0 0
  %2304 = vmatpush1.bf16.msra.mxu0 0
  %2305 = vmatprep.subr.bf16.mxu0 0
  %2306 = vmatpush1.bf16.msra.mxu0 0
  %2307 = vmatprep.subr.bf16.mxu0 0
  %2308 = vmatpush1.bf16.msra.mxu0 0
  %2309 = vmatprep.subr.bf16.mxu0 0
  %2310 = vmatpush1.bf16.msra.mxu0 0
  %2311 = vmatprep.subr.bf16.mxu0 0
  %2312 = vmatpush1.bf16.msra.mxu0 0
  %2313 = vmatprep.mubr.bf16.mxu0 0
  %2314 = vmatmul.mubr.bf16.gmra.mrb[0].mxu0 %v2276
  %v2315 = vpop.f32.mrb[0].mxu0
  %v2316 = vadd.f32 0.0, %v2315
  %v2317 = vpop.f32.mrb[0].mxu0
  %v2318 = vpop.f32.mrb[0].mxu0
  %v2319 = vadd.f32 0.0, %v2318
  %v2320 = vpop.f32.mrb[0].mxu0
  %2321 = vmatprep.mubr.bf16.mxu0 0
  %2322 = vmatmul.mubr.bf16.gmra.mrb[0].mxu0 %v2279
  %v2323 = vpop.f32.mrb[0].mxu0
  %v2324 = vadd.f32 0.0, %v2323
  %v2325 = vpop.f32.mrb[0].mxu0
  %v2326 = vpop.f32.mrb[0].mxu0
  %v2327 = vadd.f32 0.0, %v2326
  %v2328 = vpop.f32.mrb[0].mxu0
  %2329 = vdwg.mxu0
  %v2330 = vadd.f32 %v2262, %v2316
  %v2331 = vadd.f32 %v2263, %v2319
  %v2332 = vadd.f32 %v2264, %v2324
  %v2333 = vadd.f32 %v2265, %v2327
  %s2334 = scalar_lea.vmem %s9, 64
  %v2335 = vld [vmem:[%s2334] sm:$0xf]
  %v2336 = vld [vmem:[%s2334 + $0x4] sm:$0xf]
  %v2339 = vunpack.c.l.b16 %v2335
  %v2340 = vunpack.c.l.b16 %v2336
  %v2341 = vpack.c.b16 %v2340, %v2339
  %v2344 = vsel %vm1341, %v1797, 0
  %v2347 = vsel %vm1341, %v1798, 0
  %2349 = vmatprep.subr.bf16.mxu0 0
  %2350 = vmatpush1.bf16.msra.mxu0 %v2341
  %2351 = vmatprep.subr.bf16.mxu0 0
  %2352 = vmatpush1.bf16.msra.mxu0 0
  %2353 = vmatprep.subr.bf16.mxu0 0
  %2354 = vmatpush1.bf16.msra.mxu0 0
  %2355 = vmatprep.subr.bf16.mxu0 0
  %2356 = vmatpush1.bf16.msra.mxu0 0
  %2357 = vmatprep.subr.bf16.mxu0 0
  %2358 = vmatpush1.bf16.msra.mxu0 0
  %2359 = vmatprep.subr.bf16.mxu0 0
  %2360 = vmatpush1.bf16.msra.mxu0 0
  %2361 = vmatprep.subr.bf16.mxu0 0
  %2362 = vmatpush1.bf16.msra.mxu0 0
  %2363 = vmatprep.subr.bf16.mxu0 0
  %2364 = vmatpush1.bf16.msra.mxu0 0
  %2365 = vmatprep.subr.bf16.mxu0 0
  %2366 = vmatpush1.bf16.msra.mxu0 0
  %2367 = vmatprep.subr.bf16.mxu0 0
  %2368 = vmatpush1.bf16.msra.mxu0 0
  %2369 = vmatprep.subr.bf16.mxu0 0
  %2370 = vmatpush1.bf16.msra.mxu0 0
  %2371 = vmatprep.subr.bf16.mxu0 0
  %2372 = vmatpush1.bf16.msra.mxu0 0
  %2373 = vmatprep.subr.bf16.mxu0 0
  %2374 = vmatpush1.bf16.msra.mxu0 0
  %2375 = vmatprep.subr.bf16.mxu0 0
  %2376 = vmatpush1.bf16.msra.mxu0 0
  %2377 = vmatprep.subr.bf16.mxu0 0
  %2378 = vmatpush1.bf16.msra.mxu0 0
  %2379 = vmatprep.subr.bf16.mxu0 0
  %2380 = vmatpush1.bf16.msra.mxu0 0
  %2381 = vmatprep.mubr.bf16.mxu0 0
  %2382 = vmatmul.mubr.bf16.gmra.mrb[0].mxu0 %v2344
  %v2383 = vpop.f32.mrb[0].mxu0
  %v2384 = vadd.f32 0.0, %v2383
  %v2385 = vpop.f32.mrb[0].mxu0
  %v2386 = vpop.f32.mrb[0].mxu0
  %v2387 = vadd.f32 0.0, %v2386
  %v2388 = vpop.f32.mrb[0].mxu0
  %2389 = vmatprep.mubr.bf16.mxu0 0
  %2390 = vmatmul.mubr.bf16.gmra.mrb[0].mxu0 %v2347
  %v2391 = vpop.f32.mrb[0].mxu0
  %v2392 = vadd.f32 0.0, %v2391
  %v2393 = vpop.f32.mrb[0].mxu0
  %v2394 = vpop.f32.mrb[0].mxu0
  %v2395 = vadd.f32 0.0, %v2394
  %v2396 = vpop.f32.mrb[0].mxu0
  %2397 = vdwg.mxu0
  %v2398 = vadd.f32 %v2330, %v2384
  %v2399 = vadd.f32 %v2331, %v2387
  %v2400 = vadd.f32 %v2332, %v2392
  %v2401 = vadd.f32 %v2333, %v2395
  %v2402 = vld [vmem:[%s10] sm:$0x1]
  %v2404 = vlaneseq
  %v2405 = vshrl.u32 %v2404, 7
  %v2406 = vsub.s32 0, %v2405
  %v2407 = vrot.slane %v2402, %v2406
  %v2409 = vadd.f32 %v2398, %v2407
  %v2410 = vadd.f32 %v2399, %v2407
  %v2411 = vadd.f32 %v2400, %v2407
  %v2412 = vadd.f32 %v2401, %v2407
  %v2413 = vsub.f32 0.0, %v2409
  %v2414 = vsub.f32 0.0, %v2410
  %v2415 = vsub.f32 0.0, %v2411
  %v2416 = vsub.f32 0.0, %v2412
  %v2417 = vmul.f32 %v2413, 1.442695
  %v2418 = vpow.pop %v2417
  %v2419 = vmul.f32 %v2414, 1.442695
  %v2420 = vpow.pop %v2419
  %v2421 = vmul.f32 %v2415, 1.442695
  %v2422 = vpow.pop %v2421
  %v2423 = vmul.f32 %v2416, 1.442695
  %v2424 = vpow.pop %v2423
  %v2425 = vadd.f32 %v2418, 1.0
  %v2426 = vadd.f32 %v2420, 1.0
  %v2427 = vadd.f32 %v2422, 1.0
  %v2428 = vadd.f32 %v2424, 1.0
  %v2429 = vrcp.pop %v2425
  %v2430 = vrcp.pop %v2426
  %v2431 = vrcp.pop %v2427
  %v2432 = vrcp.pop %v2428
  %v2433 = vmul.f32 %v2409, %v2429
  %v2434 = vmul.f32 %v2410, %v2430
  %v2435 = vmul.f32 %v2411, %v2431
  %v2436 = vmul.f32 %v2412, %v2432
  %v2437 = vpack.c.bf16 %v2434, %v2433
  %v2438 = vpack.c.bf16 %v2436, %v2435
  %v2439 = vld [vmem:[%s11] sm:$0xf]
  %v2440 = vld [vmem:[%s11 + $0x4] sm:$0xf]
  %v2441 = vld [vmem:[%s11 + $0x8] sm:$0xf]
  %v2442 = vld [vmem:[%s11 + $0xc] sm:$0xf]
  %v2443 = vld [vmem:[%s12] sm:$0x1]
  %v2445 = vlaneseq
  %v2446 = vshrl.u32 %v2445, 7
  %v2447 = vsub.s32 0, %v2446
  %v2448 = vrot.slane %v2443, %v2447
  %v2454 = vunpack.c.l.b16 %v2439
  %v2455 = vunpack.c.l.b16 %v2440
  %v2456 = vunpack.c.l.b16 %v2441
  %v2457 = vunpack.c.l.b16 %v2442
  %v2458 = vpack.c.b16 %v2455, %v2454
  %v2459 = vpack.c.b16 %v2457, %v2456
  %v2463 = vsel %vm1549, %v2437, 0
  %v2466 = vsel %vm1549, %v2438, 0
  %2468 = vmatprep.subr.bf16.mxu0 0
  %2469 = vmatpush1.bf16.msra.mxu0 %v2458
  %2470 = vmatprep.subr.bf16.mxu0 0
  %2471 = vmatpush1.bf16.msra.mxu0 %v2459
  %2472 = vmatprep.subr.bf16.mxu0 0
  %2473 = vmatpush1.bf16.msra.mxu0 0
  %2474 = vmatprep.subr.bf16.mxu0 0
  %2475 = vmatpush1.bf16.msra.mxu0 0
  %2476 = vmatprep.subr.bf16.mxu0 0
  %2477 = vmatpush1.bf16.msra.mxu0 0
  %2478 = vmatprep.subr.bf16.mxu0 0
  %2479 = vmatpush1.bf16.msra.mxu0 0
  %2480 = vmatprep.subr.bf16.mxu0 0
  %2481 = vmatpush1.bf16.msra.mxu0 0
  %2482 = vmatprep.subr.bf16.mxu0 0
  %2483 = vmatpush1.bf16.msra.mxu0 0
  %2484 = vmatprep.subr.bf16.mxu0 0
  %2485 = vmatpush1.bf16.msra.mxu0 0
  %2486 = vmatprep.subr.bf16.mxu0 0
  %2487 = vmatpush1.bf16.msra.mxu0 0
  %2488 = vmatprep.subr.bf16.mxu0 0
  %2489 = vmatpush1.bf16.msra.mxu0 0
  %2490 = vmatprep.subr.bf16.mxu0 0
  %2491 = vmatpush1.bf16.msra.mxu0 0
  %2492 = vmatprep.subr.bf16.mxu0 0
  %2493 = vmatpush1.bf16.msra.mxu0 0
  %2494 = vmatprep.subr.bf16.mxu0 0
  %2495 = vmatpush1.bf16.msra.mxu0 0
  %2496 = vmatprep.subr.bf16.mxu0 0
  %2497 = vmatpush1.bf16.msra.mxu0 0
  %2498 = vmatprep.subr.bf16.mxu0 0
  %2499 = vmatpush1.bf16.msra.mxu0 0
  %2500 = vmatprep.mubr.bf16.mxu0 0
  %2501 = vmatmul.mubr.bf16.gmra.mrb[0].mxu0 %v2463
  %v2502 = vpop.f32.mrb[0].mxu0
  %v2503 = vadd.f32 %v2448, %v2502
  %v2504 = vpop.f32.mrb[0].mxu0
  %v2505 = vpop.f32.mrb[0].mxu0
  %v2506 = vadd.f32 %v2448, %v2505
  %v2507 = vpop.f32.mrb[0].mxu0
  %2508 = vmatprep.mubr.bf16.mxu0 0
  %2509 = vmatmul.mubr.bf16.gmra.mrb[0].mxu0 %v2466
  %v2510 = vpop.f32.mrb[0].mxu0
  %v2511 = vadd.f32 %v2448, %v2510
  %v2512 = vpop.f32.mrb[0].mxu0
  %v2513 = vpop.f32.mrb[0].mxu0
  %v2514 = vadd.f32 %v2448, %v2513
  %v2515 = vpop.f32.mrb[0].mxu0
  %2516 = vdwg.mxu0
  %v2517 = vlaneseq
  %v2518 = vand.u32 %v2517, 127
  %vm2519 = vcmp.ge.s32.totalorder %v2518, 4
  %v2520 = vsub.f32 0.0, %v2503
  %v2521 = vsub.f32 0.0, %v2506
  %v2522 = vsub.f32 0.0, %v2511
  %v2523 = vsub.f32 0.0, %v2514
  %v2524 = vmul.f32 %v2520, 1.442695
  %v2525 = vpow.pop %v2524
  %v2526 = vmul.f32 %v2521, 1.442695
  %v2527 = vpow.pop %v2526
  %v2528 = vmul.f32 %v2522, 1.442695
  %v2529 = vpow.pop %v2528
  %v2530 = vmul.f32 %v2523, 1.442695
  %v2531 = vpow.pop %v2530
  %v2532 = vadd.f32 %v2525, 1.0
  %v2533 = vadd.f32 %v2527, 1.0
  %v2534 = vadd.f32 %v2529, 1.0
  %v2535 = vadd.f32 %v2531, 1.0
  %v2536 = vrcp.pop %v2532
  %v2537 = vrcp.pop %v2533
  %v2538 = vrcp.pop %v2534
  %v2539 = vrcp.pop %v2535
  %v2540 = vsel %vm2519, %v2536, %v2503
  %v2541 = vsel %vm2519, %v2537, %v2506
  %v2542 = vsel %vm2519, %v2538, %v2511
  %v2543 = vsel %vm2519, %v2539, %v2514
  %vm2544 = vcmask 72704
  %2545 = vst.msk [vmem:[%s13] sm:$0xff] %vm2544, %v2540
  %2546 = vst.msk [vmem:[%s13 + $0x8] sm:$0xff] %vm2544, %v2541
  %2547 = vst.msk [vmem:[%s13 + $0x10] sm:$0xff] %vm2544, %v2542
  %2548 = vst.msk [vmem:[%s13 + $0x18] sm:$0xff] %vm2544, %v2543
  // Predicated region
  $region54: #{yolox_deploy_forward.1} parent=0 // pred_check
    _
  $region55: #{yolox_deploy_forward.1} parent=0 // pred_check_branch
    %2550 = sbr.rel (0) target = $region57
  $region56: #{yolox_deploy_forward.1} parent=0 // pred_region
    _
  $region57: #{yolox_deploy_forward.1} parent=0 // pred_fallthru
    _
  // Predicated region
  $region58: #{yolox_deploy_forward.1} parent=0 // pred_check
    _
  $region59: #{yolox_deploy_forward.1} parent=0 // pred_check_branch
    %2552 = sbr.rel (0) target = $region61
  $region60: #{yolox_deploy_forward.1} parent=0 // pred_region
    _
  $region61: #{yolox_deploy_forward.1} parent=0 // pred_fallthru
    _

</llo_original>
